<compile_context>
chip_gen: v6e
topology: v6e:2x2x1
jax: 0.10.0
libtpu: 0.0.40
codegen_flags: <defaults>
</compile_context>

<pallas_src>
import functools

import jax
import jax.numpy as jnp
import numpy as np
from jax.experimental import pallas as pl
from jax.experimental.pallas import tpu as pltpu

VMEM_SPEC = pl.BlockSpec(memory_space=pltpu.MemorySpace.VMEM)
F32 = jnp.float32
BF16 = jnp.bfloat16


# ----------------------------------------------------------------------------
# The single fused kernel
# ----------------------------------------------------------------------------
def _fused_kernel(*refs, num_layers, H):
    """Whole forward pass in one kernel.

    ref layout (all VMEM, whole-array blocks, time-major activations):
      refs[0] text_all (T+1, B, E) bf16   history text emb + current utterance
      refs[1] add_proj (T+1, B, D) f32    folded speaker/emotion proj + biases
      refs[2] W_text_f (E, D) bf16        text_emb_linear folded into enc_linear
      refs[3] mask     (T, B, 1) f32      1.0 where the history position is real
      per GRU layer l (3 refs):
        wih  (I, 6H) bf16   input weights, cols = [r_f r_b z_f z_b n_f n_b]
        whh  (2H, 6H) bf16  hidden weights, block-diagonal over direction
        bias (2, 6H) f32    row0 = b_ih (+ b_hh for r,z); row1 = b_hh of n gate
      tail: wgru (2H, D) bf16, wctx (D, M) bf16,
            tail_b (4, max(D,M)) f32 = [b_gru | b_ctx | w_sla^T | b_sla]
      out_ref (B, M) f32
    """
    text_ref, add_ref, wtext_ref, mask_ref = refs[:4]
    layer_refs = [refs[4 + 3 * l: 7 + 3 * l] for l in range(num_layers)]
    wgru_ref, wctx_ref, tail_ref, out_ref = refs[4 + 3 * num_layers:]

    T, B, _ = mask_ref.shape
    D = wgru_ref.shape[1]
    M = wctx_ref.shape[1]
    H2, H4, H6 = 2 * H, 4 * H, 6 * H

    # ---- frontend: folded text/speaker/emotion linears + enc_linear (+ReLU) --
    enc = jnp.einsum('tbe,ed->tbd', text_ref[...], wtext_ref[...],
                     preferred_element_type=F32) + add_ref[...]
    enc = jnp.maximum(enc, 0.0)                      # (T+1, B, D) f32
    enc_cur = enc[T]                                 # (B, D)
    src = enc[:T]                                    # (T, B, D)

    mvals = mask_ref[...]                            # (T, B, 1)

    # Lane selectors: within every 2H block, lanes [0:H] = forward direction,
    # lanes [H:2H] = backward direction.
    lane6 = jax.lax.broadcasted_iota(jnp.int32, (1, H6), 1)
    is_fwd6 = (lane6 % H2) < H                       # (1, 6H) bool
    lane2 = jax.lax.broadcasted_iota(jnp.int32, (1, H2), 1)
    is_fwd2 = lane2 < H                              # (1, 2H) bool

    # Per-step direction masks, hoisted out of the layer/time loops.
    m_steps = [jnp.where(is_fwd2,
                         jnp.broadcast_to(mvals[i], (B, H2)),
                         jnp.broadcast_to(mvals[T - 1 - i], (B, H2)))
               for i in range(T)]                    # each (B, 2H)

    # ---- bidirectional GRU stack --------------------------------------------
    # TODO(synk): inter-layer nn.GRU dropout omitted (eval-mode semantics).
    # TODO(synk): on v7x the two directions could run on separate TensorCores
    #             (pl.core_map); kept single-core here for portability.
    for wih_ref, whh_ref, bias_ref in layer_refs:
        whh = whh_ref[...]                           # (2H, 6H) bf16, block-diag
        bgx = bias_ref[0:1]                          # (1, 6H) b_ih (+ b_hh r,z)
        bhn = bias_ref[1:2]                          # (1, 6H) b_hh of n gate
        # Input projection: all gates, both directions, one matmul per layer.
        gx = jnp.einsum('tbi,ik->tbk', src.astype(BF16), wih_ref[...],
                        preferred_element_type=F32) + bgx      # (T, B, 6H)

        h = jnp.zeros((B, H2), F32)                  # [h_fwd | h_bwd] on lanes
        outs = []
        for i in range(T):                           # static unroll (T is small)
            # fwd gate inputs from step i, bwd from step T-1-i (lane select,
            # independent of h -> off the serial critical path).
            gxs = jnp.where(is_fwd6, gx[i], gx[T - 1 - i])     # (B, 6H)
            m = m_steps[i]                                     # (B, 2H)
            # The only serial op: one bf16 MXU matmul for both dirs / all gates.
            ghb = jnp.dot(h.astype(BF16), whh,
                          preferred_element_type=F32) + bhn    # (B, 6H)
            rz = jax.nn.sigmoid(gxs[:, :H4] + ghb[:, :H4])
            r, z = rz[:, :H2], rz[:, H2:]
            n = jnp.tanh(gxs[:, H4:] + r * ghb[:, H4:])
            h_upd = m * ((1.0 - z) * n + z * h)      # masked new hidden
            h = h_upd + (h - m * h)                  # freeze beyond true length
            outs.append(h_upd)                       # = h_new * mask (zero pad)
        # Reassemble time-major (T, B, 2H): fwd half of step t and bwd half of
        # step T-1-t both correspond to sequence position t.
        src = jnp.stack([jnp.where(is_fwd2, outs[t], outs[T - 1 - t])
                         for t in range(T)], axis=0)

    # ---- backend: gru_linear(+ReLU) -> masked_fill -> context_linear -> SLA --
    bgru = tail_ref[0:1, :D]
    bctx = tail_ref[1:2, :M]
    wsla = tail_ref[2:3, :M]
    bsla = tail_ref[3:4, 0:1]

    past = jnp.einsum('tbh,hd->tbd', src.astype(BF16), wgru_ref[...],
                      preferred_element_type=F32) + bgru
    past = jnp.maximum(past, 0.0) * mvals            # (T, B, D), masked_fill(0)

    ctx_in = jnp.concatenate([past, enc_cur[None]], axis=0)    # (T+1, B, D)
    ctx = jnp.einsum('tbd,dm->tbm', ctx_in.astype(BF16), wctx_ref[...],
                     preferred_element_type=F32) + bctx        # (T+1, B, M)
    # SLA logits: degenerate N=1 matmul replaced by VPU multiply + lane reduce.
    a = jnp.sum(ctx * wsla, axis=-1, keepdims=True) + bsla     # (T+1, B, 1)

    ctx_past, ctx_cur = ctx[:T], ctx[T]
    a_past, a_cur = a[:T], a[T]

    # Softmax over the (current + T past) positions, combined analytically so
    # the sublane-misaligned (B, T+1, M) concat never materializes.
    mx = jnp.maximum(jnp.max(a_past, axis=0), a_cur)           # (B, 1)
    e_past = jnp.exp(a_past - mx)                              # (T, B, 1)
    e_cur = jnp.exp(a_cur - mx)                                # (B, 1)
    denom = e_cur + jnp.sum(e_past, axis=0)                    # (B, 1)
    numer = e_cur * ctx_cur + jnp.sum(e_past * ctx_past, axis=0)
    out_ref[...] = numer / denom


# ----------------------------------------------------------------------------
# One-time parameter folding / re-layout (trace time, outside the kernel).
# ----------------------------------------------------------------------------
def fold_params(p):
    """Fold the frontend linears, fuse GRU gate/direction weights into the
    lane-packed layouts the kernel expects, and cast matmul weights to bf16."""
    D = p['W_enc'].shape[1]
    H = D
    M = p['W_ctx'].shape[1]
    P = max(D, M)
    We = p['W_enc']

    def pad_row(row, width):
        out = jnp.zeros((1, width), F32)
        return out.at[:, :row.shape[1]].set(row.astype(F32))

    tail_b = jnp.concatenate([
        pad_row(p['b_gru'], P),
        pad_row(p['b_ctx'], P),
        pad_row(p['W_sla'].T, P),          # (1, M) row vector for VPU reduce
        pad_row(p['b_sla'], P),            # scalar in column 0
    ], axis=0)                             # (4, P)

    folded = {
        'W_text_f': (p['W_text'] @ We[:D]).astype(BF16),
        'spk_tab': p['spk_table'] @ p['W_spk'] @ We[D:2 * D],
        'emo_tab': p['emo_table'] @ p['W_emo'] @ We[2 * D:3 * D],
        'b_front': (p['b_text'] @ We[:D] + p['b_spk'] @ We[D:2 * D]
                    + p['b_emo'] @ We[2 * D:3 * D] + p['b_enc']),
        'wgru': p['W_gru'].astype(BF16),   # rows = [fwd(H) | bwd(H)], matches lanes
        'wctx': p['W_ctx'].astype(BF16),
        'tail_b': tail_b,
        'D': D, 'H': H, 'M': M,
    }

    def gate(w, g):                        # columns of gate g, order [r | z | n]
        return w[:, g * H:(g + 1) * H]

    layers = []
    for lp in p['gru_layers']:
        wf, wb = lp['W_ih_f'], lp['W_ih_b']
        uf, ub = lp['W_hh_f'], lp['W_hh_b']
        bif, bib = lp['b_ih_f'], lp['b_ih_b']
        bhf, bhb = lp['b_hh_f'], lp['b_hh_b']

        # Input weights: columns [r_f r_b z_f z_b n_f n_b] -> (I, 6H).
        wih = jnp.concatenate(
            [x for g in range(3) for x in (gate(wf, g), gate(wb, g))], axis=1)

        # Hidden weights: per gate a (2H, 2H) block-diagonal over direction.
        zH = jnp.zeros((H, H), F32)
        blocks = []
        for g in range(3):
            top = jnp.concatenate([gate(uf, g), zH], axis=1)
            bot = jnp.concatenate([zH, gate(ub, g)], axis=1)
            blocks.append(jnp.concatenate([top, bot], axis=0))
        whh = jnp.concatenate(blocks, axis=1)          # (2H, 6H)

        # Biases: b_ih (+ b_hh for r,z gates); n-gate b_hh stays inside r*( . ).
        bgx = jnp.concatenate(
            [gate(bif, 0) + gate(bhf, 0), gate(bib, 0) + gate(bhb, 0),
             gate(bif, 1) + gate(bhf, 1), gate(bib, 1) + gate(bhb, 1),
             gate(bif, 2),                gate(bib, 2)], axis=1)
        z1 = jnp.zeros((1, H), F32)
        bhn = jnp.concatenate([z1, z1, z1, z1, gate(bhf, 2), gate(bhb, 2)], axis=1)

        layers.append(dict(wih=wih.astype(BF16), whh=whh.astype(BF16),
                           bias=jnp.concatenate([bgx, bhn], axis=0)))  # (2, 6H)
    folded['layers'] = layers
    return folded


# ----------------------------------------------------------------------------
# Forward-pass wrapper (masks, concats, gathers, layout) + the kernel call
# ----------------------------------------------------------------------------
def conversational_context_encoder(fp, text_emb, speaker, emotion,
                                   history_text_emb, history_speaker,
                                   history_emotion, history_lens):
    B, T, _ = history_text_emb.shape
    M = fp['M']

    # make_pad_mask(history_lens): valid = 1.0 where position < length.
    idx = jnp.arange(T, dtype=jnp.int32)
    valid = (idx[None, :] < history_lens[:, None]).astype(F32)          # (B, T)
    mask_tm = jnp.transpose(valid)[:, :, None]                          # (T, B, 1)

    # Glue: append current utterance, gather pre-projected spk/emo tables.
    text_all = jnp.concatenate([history_text_emb, text_emb[:, None, :]], axis=1)
    spk_ids = jnp.concatenate([history_speaker, speaker[:, None]], axis=1)
    emo_ids = jnp.concatenate([history_emotion, emotion[:, None]], axis=1)
    add_proj = (jnp.take(fp['spk_tab'], spk_ids, axis=0)
                + jnp.take(fp['emo_tab'], emo_ids, axis=0) + fp['b_front'])

    # Time-major layout for the kernel; text is a pure matmul operand -> bf16.
    text_tm = jnp.transpose(text_all, (1, 0, 2)).astype(BF16)           # (T+1, B, E)
    add_tm = jnp.transpose(add_proj, (1, 0, 2))                         # (T+1, B, D)

    args = [text_tm, add_tm, fp['W_text_f'], mask_tm]
    for lp in fp['layers']:
        args += [lp['wih'], lp['whh'], lp['bias']]
    args += [fp['wgru'], fp['wctx'], fp['tail_b']]

    kern = functools.partial(_fused_kernel, num_layers=len(fp['layers']),
                             H=fp['H'])
    return pl.pallas_call(
        kern,
        out_shape=jax.ShapeDtypeStruct((B, M), F32),
        in_specs=[VMEM_SPEC] * len(args),
        out_specs=VMEM_SPEC,
    )(*args)


# ----------------------------------------------------------------------------
# Plain-JAX reference (direct transcription of the PyTorch module) for checking
# ----------------------------------------------------------------------------
def reference_forward(p, text_emb, speaker, emotion,
                      history_text_emb, history_speaker,
                      history_emotion, history_lens):
    B, T, _ = history_text_emb.shape
    H = p['gru_layers'][0]['W_hh_f'].shape[0]
    idx = jnp.arange(T, dtype=jnp.int32)
    valid = (idx[None, :] < history_lens[:, None]).astype(F32)          # (B, T)

    text_all = jnp.concatenate([history_text_emb, text_emb[:, None, :]], axis=1)
    spk_ids = jnp.concatenate([history_speaker, speaker[:, None]], axis=1)
    emo_ids = jnp.concatenate([history_emotion, emotion[:, None]], axis=1)
    t = text_all @ p['W_text'] + p['b_text']
    s = jnp.take(p['spk_table'], spk_ids, axis=0) @ p['W_spk'] + p['b_spk']
    e = jnp.take(p['emo_table'], emo_ids, axis=0) @ p['W_emo'] + p['b_emo']
    enc = jnp.maximum(jnp.concatenate([t, s, e], axis=-1) @ p['W_enc'] + p['b_enc'], 0.0)
    enc_past, enc_cur = enc[:, :T], enc[:, T:]

    def gru_dir(x, lp, suf, reverse):
        Wih, bih = lp['W_ih_' + suf], lp['b_ih_' + suf]
        Whh, bhh = lp['W_hh_' + suf], lp['b_hh_' + suf]
        h = jnp.zeros((B, H), F32)
        outs = [None] * T
        order = range(T - 1, -1, -1) if reverse else range(T)
        for tt in order:
            m = valid[:, tt][:, None]
            gx = x[:, tt] @ Wih + bih
            gh = h @ Whh + bhh
            r = jax.nn.sigmoid(gx[:, :H] + gh[:, :H])
            z = jax.nn.sigmoid(gx[:, H:2 * H] + gh[:, H:2 * H])
            n = jnp.tanh(gx[:, 2 * H:] + r * gh[:, 2 * H:])
            h = m * ((1.0 - z) * n + z * h) + (1.0 - m) * h
            outs[tt] = h * m
        return jnp.stack(outs, axis=1)                                  # (B, T, H)

    x = enc_past
    for lp in p['gru_layers']:
        x = jnp.concatenate([gru_dir(x, lp, 'f', False),
                             gru_dir(x, lp, 'b', True)], axis=-1)
    past = jnp.maximum(x @ p['W_gru'] + p['b_gru'], 0.0) * valid[:, :, None]
    ctx = jnp.concatenate([enc_cur, past], axis=1) @ p['W_ctx'] + p['b_ctx']
    attn = ctx @ p['W_sla'] + p['b_sla']                                # (B, T+1, 1)
    score = jax.nn.softmax(attn, axis=1)
    return jnp.sum(score * ctx, axis=1)                                 # (B, d_model)


# ----------------------------------------------------------------------------
# Deterministic parameter init (PyTorch-like layouts; gate order [r|z|n]).
# ----------------------------------------------------------------------------
def init_params(key, *, d_model, d_cont, text_emb_size, num_layers, n_spk, n_emo):
    keys = iter(jax.random.split(key, 64))

    def lin(fin, fout):
        k1, k2 = jax.random.split(next(keys))
        sc = 1.0 / jnp.sqrt(jnp.float32(fin))
        w = jax.random.uniform(k1, (fin, fout), F32, -sc, sc)
        b = jax.random.uniform(k2, (1, fout), F32, -sc, sc)
        return w, b

    p = {}
    p['W_text'], p['b_text'] = lin(text_emb_size, d_cont)
    p['W_spk'], p['b_spk'] = lin(d_model, d_cont)
    p['W_emo'], p['b_emo'] = lin(d_model, d_cont)
    p['W_enc'], p['b_enc'] = lin(3 * d_cont, d_cont)
    p['W_gru'], p['b_gru'] = lin(2 * d_cont, d_cont)
    p['W_ctx'], p['b_ctx'] = lin(d_cont, d_model)
    p['W_sla'], p['b_sla'] = lin(d_model, 1)
    p['spk_table'] = 0.1 * jax.random.normal(next(keys), (n_spk, d_model), F32)
    p['emo_table'] = 0.1 * jax.random.normal(next(keys), (n_emo, d_model), F32)

    layers = []
    fin = d_cont
    for _ in range(num_layers):
        lp = {}
        for d in ('f', 'b'):
            lp[f'W_ih_{d}'], lp[f'b_ih_{d}'] = lin(fin, 3 * d_cont)
            lp[f'W_hh_{d}'], lp[f'b_hh_{d}'] = lin(d_cont, 3 * d_cont)
        layers.append(lp)
        fin = 2 * d_cont
    p['gru_layers'] = layers
    return p


if __name__ == "__main__":
    B, T = 2, 8
    d_model, d_cont, text_emb_size = 32, 32, 48
    n_spk, n_emo = 4, 5

    key = jax.random.PRNGKey(0)
    kp, kd = jax.random.split(key)
    dk = jax.random.split(kd, 6)
    text_emb = jax.random.normal(dk[0], (B, text_emb_size), F32)
    history_text_emb = jax.random.normal(dk[1], (B, T, text_emb_size), F32)
    speaker = jax.random.randint(dk[2], (B,), 0, n_spk, dtype=jnp.int32)
    history_speaker = jax.random.randint(dk[3], (B, T), 0, n_spk, dtype=jnp.int32)
    emotion = jax.random.randint(dk[4], (B,), 0, n_emo, dtype=jnp.int32)
    history_emotion = jax.random.randint(dk[5], (B, T), 0, n_emo, dtype=jnp.int32)
    history_lens = jnp.array([T, 5], jnp.int32)          # max(history_lens) == T

    for num_layers in (1, 2):
        params = init_params(kp, d_model=d_model, d_cont=d_cont,
                             text_emb_size=text_emb_size, num_layers=num_layers,
                             n_spk=n_spk, n_emo=n_emo)
        with jax.default_matmul_precision("float32"):
            folded = fold_params(params)
            ref = reference_forward(params, text_emb, speaker, emotion,
                                    history_text_emb, history_speaker,
                                    history_emotion, history_lens)
        out = conversational_context_encoder(folded, text_emb, speaker, emotion,
                                             history_text_emb, history_speaker,
                                             history_emotion, history_lens)
        out = jax.block_until_ready(out)
        assert out.shape == (B, d_model) and out.dtype == jnp.float32
        # Slightly relaxed vs a pure-f32 check: kernel matmul operands are bf16
        # (f32 accumulation), the reference is full f32.
        np.testing.assert_allclose(np.asarray(out),
                                   np.asarray(jax.block_until_ready(ref)),
                                   rtol=2e-2, atol=2e-2)
    print("KERNEL_OK")
</pallas_src>

<mosaic_0001>
module attributes {stable_mosaic.version = 11 : i64} {
  func.func @_fused_kernel(%arg0: memref<9x2x48xbf16, #tpu.memory_space<vmem>>, %arg1: memref<9x2x32xf32, #tpu.memory_space<vmem>>, %arg2: memref<48x32xbf16, #tpu.memory_space<vmem>>, %arg3: memref<8x2x1xf32, #tpu.memory_space<vmem>>, %arg4: memref<32x192xbf16, #tpu.memory_space<vmem>>, %arg5: memref<64x192xbf16, #tpu.memory_space<vmem>>, %arg6: memref<2x192xf32, #tpu.memory_space<vmem>>, %arg7: memref<64x32xbf16, #tpu.memory_space<vmem>>, %arg8: memref<32x32xbf16, #tpu.memory_space<vmem>>, %arg9: memref<4x32xf32, #tpu.memory_space<vmem>>, %arg10: memref<2x32xf32, #tpu.memory_space<vmem>>) attributes {dimension_semantics = [], scalar_prefetch = 0 : i64, scratch_operands = 0 : i64, tpu.core_type = #tpu.core_type<tc>} {
    %c0 = arith.constant 0 : index
    %c0_0 = arith.constant 0 : index
    %c0_1 = arith.constant 0 : index
    %0 = vector.load %arg0[%c0, %c0_0, %c0_1] : memref<9x2x48xbf16, #tpu.memory_space<vmem>>, vector<9x2x48xbf16>
    %c0_2 = arith.constant 0 : index
    %c0_3 = arith.constant 0 : index
    %1 = vector.load %arg2[%c0_2, %c0_3] : memref<48x32xbf16, #tpu.memory_space<vmem>>, vector<48x32xbf16>
    "tpu.trace_start"() <{level = 10 : i32, message = "tbe,ed->tbd"}> : () -> ()
    %cst = arith.constant dense<0.000000e+00> : vector<9x2x32xf32>
    %2 = tpu.matmul %0, %1, %cst {dimension_numbers = #tpu.dot_dimension_numbers<[2], [0], [0, 1], [1], [0, 0, 0, 1, 1, 1], [], []>} : vector<9x2x48xbf16>, vector<48x32xbf16>, vector<9x2x32xf32> -> vector<9x2x32xf32>
    "tpu.trace_stop"() : () -> ()
    %c0_4 = arith.constant 0 : index
    %c0_5 = arith.constant 0 : index
    %c0_6 = arith.constant 0 : index
    %3 = vector.load %arg1[%c0_4, %c0_5, %c0_6] : memref<9x2x32xf32, #tpu.memory_space<vmem>>, vector<9x2x32xf32>
    %4 = arith.addf %2, %3 : vector<9x2x32xf32>
    %cst_7 = arith.constant 0.000000e+00 : f32
    %5 = vector.broadcast %cst_7 : f32 to vector<9x2x32xf32>
    %6 = arith.maximumf %4, %5 : vector<9x2x32xf32>
    %7 = vector.extract_strided_slice %6 {offsets = [8, 0, 0], sizes = [1, 2, 32], strides = [1, 1, 1]} : vector<9x2x32xf32> to vector<1x2x32xf32>
    %8 = vector.shape_cast %7 : vector<1x2x32xf32> to vector<2x32xf32>
    %9 = vector.extract_strided_slice %6 {offsets = [0, 0, 0], sizes = [8, 2, 32], strides = [1, 1, 1]} : vector<9x2x32xf32> to vector<8x2x32xf32>
    %c0_8 = arith.constant 0 : index
    %c0_9 = arith.constant 0 : index
    %c0_10 = arith.constant 0 : index
    %10 = vector.load %arg3[%c0_8, %c0_9, %c0_10] : memref<8x2x1xf32, #tpu.memory_space<vmem>>, vector<8x2x1xf32>
    %11 = tpu.iota {dimensions = array<i32: 1>} : vector<1x192xi32>
    %c64_i32 = arith.constant 64 : i32
    %c0_i32 = arith.constant 0 : i32
    %12 = arith.cmpi eq, %c64_i32, %c0_i32 : i32
    %c1_i32 = arith.constant 1 : i32
    %13 = arith.select %12, %c1_i32, %c64_i32 : i32
    %14 = vector.broadcast %13 : i32 to vector<1x192xi32>
    %15 = arith.remsi %11, %14 : vector<1x192xi32>
    %c0_i32_11 = arith.constant 0 : i32
    %16 = vector.broadcast %c0_i32_11 : i32 to vector<1x192xi32>
    %17 = arith.cmpi ne, %15, %16 : vector<1x192xi32>
    %c0_i32_12 = arith.constant 0 : i32
    %18 = vector.broadcast %c0_i32_12 : i32 to vector<1x192xi32>
    %19 = arith.cmpi slt, %15, %18 : vector<1x192xi32>
    %c0_i32_13 = arith.constant 0 : i32
    %20 = arith.cmpi slt, %13, %c0_i32_13 : i32
    %21 = vector.broadcast %20 : i1 to vector<1x192xi1>
    %22 = vector.broadcast %21 : vector<1x192xi1> to vector<1x192xi1>
    %23 = arith.xori %19, %22 : vector<1x192xi1>
    %24 = arith.andi %23, %17 : vector<1x192xi1>
    %25 = vector.broadcast %13 : i32 to vector<1x192xi32>
    %26 = arith.addi %15, %25 : vector<1x192xi32>
    %27 = arith.select %24, %26, %15 : vector<1x192xi1>, vector<1x192xi32>
    %c32_i32 = arith.constant 32 : i32
    %28 = vector.broadcast %c32_i32 : i32 to vector<1x192xi32>
    %29 = arith.cmpi slt, %27, %28 : vector<1x192xi32>
    %30 = tpu.iota {dimensions = array<i32: 1>} : vector<1x64xi32>
    %c32_i32_14 = arith.constant 32 : i32
    %31 = vector.broadcast %c32_i32_14 : i32 to vector<1x64xi32>
    %32 = arith.cmpi slt, %30, %31 : vector<1x64xi32>
    %33 = vector.extract_strided_slice %10 {offsets = [0, 0, 0], sizes = [1, 2, 1], strides = [1, 1, 1]} : vector<8x2x1xf32> to vector<1x2x1xf32>
    %34 = vector.shape_cast %33 : vector<1x2x1xf32> to vector<2x1xf32>
    %35 = vector.shape_cast %34 : vector<2x1xf32> to vector<2x1xf32>
    %36 = vector.broadcast %35 : vector<2x1xf32> to vector<2x64xf32>
    %37 = vector.extract_strided_slice %10 {offsets = [7, 0, 0], sizes = [1, 2, 1], strides = [1, 1, 1]} : vector<8x2x1xf32> to vector<1x2x1xf32>
    %38 = vector.shape_cast %37 : vector<1x2x1xf32> to vector<2x1xf32>
    %39 = vector.shape_cast %38 : vector<2x1xf32> to vector<2x1xf32>
    %40 = vector.broadcast %39 : vector<2x1xf32> to vector<2x64xf32>
    %41 = vector.shape_cast %32 : vector<1x64xi1> to vector<1x64xi1>
    %42 = vector.broadcast %41 : vector<1x64xi1> to vector<2x64xi1>
    %43 = arith.select %42, %36, %40 : vector<2x64xi1>, vector<2x64xf32>
    %44 = vector.extract_strided_slice %10 {offsets = [1, 0, 0], sizes = [1, 2, 1], strides = [1, 1, 1]} : vector<8x2x1xf32> to vector<1x2x1xf32>
    %45 = vector.shape_cast %44 : vector<1x2x1xf32> to vector<2x1xf32>
    %46 = vector.shape_cast %45 : vector<2x1xf32> to vector<2x1xf32>
    %47 = vector.broadcast %46 : vector<2x1xf32> to vector<2x64xf32>
    %48 = vector.extract_strided_slice %10 {offsets = [6, 0, 0], sizes = [1, 2, 1], strides = [1, 1, 1]} : vector<8x2x1xf32> to vector<1x2x1xf32>
    %49 = vector.shape_cast %48 : vector<1x2x1xf32> to vector<2x1xf32>
    %50 = vector.shape_cast %49 : vector<2x1xf32> to vector<2x1xf32>
    %51 = vector.broadcast %50 : vector<2x1xf32> to vector<2x64xf32>
    %52 = vector.shape_cast %32 : vector<1x64xi1> to vector<1x64xi1>
    %53 = vector.broadcast %52 : vector<1x64xi1> to vector<2x64xi1>
    %54 = arith.select %53, %47, %51 : vector<2x64xi1>, vector<2x64xf32>
    %55 = vector.extract_strided_slice %10 {offsets = [2, 0, 0], sizes = [1, 2, 1], strides = [1, 1, 1]} : vector<8x2x1xf32> to vector<1x2x1xf32>
    %56 = vector.shape_cast %55 : vector<1x2x1xf32> to vector<2x1xf32>
    %57 = vector.shape_cast %56 : vector<2x1xf32> to vector<2x1xf32>
    %58 = vector.broadcast %57 : vector<2x1xf32> to vector<2x64xf32>
    %59 = vector.extract_strided_slice %10 {offsets = [5, 0, 0], sizes = [1, 2, 1], strides = [1, 1, 1]} : vector<8x2x1xf32> to vector<1x2x1xf32>
    %60 = vector.shape_cast %59 : vector<1x2x1xf32> to vector<2x1xf32>
    %61 = vector.shape_cast %60 : vector<2x1xf32> to vector<2x1xf32>
    %62 = vector.broadcast %61 : vector<2x1xf32> to vector<2x64xf32>
    %63 = vector.shape_cast %32 : vector<1x64xi1> to vector<1x64xi1>
    %64 = vector.broadcast %63 : vector<1x64xi1> to vector<2x64xi1>
    %65 = arith.select %64, %58, %62 : vector<2x64xi1>, vector<2x64xf32>
    %66 = vector.extract_strided_slice %10 {offsets = [3, 0, 0], sizes = [1, 2, 1], strides = [1, 1, 1]} : vector<8x2x1xf32> to vector<1x2x1xf32>
    %67 = vector.shape_cast %66 : vector<1x2x1xf32> to vector<2x1xf32>
    %68 = vector.shape_cast %67 : vector<2x1xf32> to vector<2x1xf32>
    %69 = vector.broadcast %68 : vector<2x1xf32> to vector<2x64xf32>
    %70 = vector.extract_strided_slice %10 {offsets = [4, 0, 0], sizes = [1, 2, 1], strides = [1, 1, 1]} : vector<8x2x1xf32> to vector<1x2x1xf32>
    %71 = vector.shape_cast %70 : vector<1x2x1xf32> to vector<2x1xf32>
    %72 = vector.shape_cast %71 : vector<2x1xf32> to vector<2x1xf32>
    %73 = vector.broadcast %72 : vector<2x1xf32> to vector<2x64xf32>
    %74 = vector.shape_cast %32 : vector<1x64xi1> to vector<1x64xi1>
    %75 = vector.broadcast %74 : vector<1x64xi1> to vector<2x64xi1>
    %76 = arith.select %75, %69, %73 : vector<2x64xi1>, vector<2x64xf32>
    %77 = vector.extract_strided_slice %10 {offsets = [4, 0, 0], sizes = [1, 2, 1], strides = [1, 1, 1]} : vector<8x2x1xf32> to vector<1x2x1xf32>
    %78 = vector.shape_cast %77 : vector<1x2x1xf32> to vector<2x1xf32>
    %79 = vector.shape_cast %78 : vector<2x1xf32> to vector<2x1xf32>
    %80 = vector.broadcast %79 : vector<2x1xf32> to vector<2x64xf32>
    %81 = vector.extract_strided_slice %10 {offsets = [3, 0, 0], sizes = [1, 2, 1], strides = [1, 1, 1]} : vector<8x2x1xf32> to vector<1x2x1xf32>
    %82 = vector.shape_cast %81 : vector<1x2x1xf32> to vector<2x1xf32>
    %83 = vector.shape_cast %82 : vector<2x1xf32> to vector<2x1xf32>
    %84 = vector.broadcast %83 : vector<2x1xf32> to vector<2x64xf32>
    %85 = vector.shape_cast %32 : vector<1x64xi1> to vector<1x64xi1>
    %86 = vector.broadcast %85 : vector<1x64xi1> to vector<2x64xi1>
    %87 = arith.select %86, %80, %84 : vector<2x64xi1>, vector<2x64xf32>
    %88 = vector.extract_strided_slice %10 {offsets = [5, 0, 0], sizes = [1, 2, 1], strides = [1, 1, 1]} : vector<8x2x1xf32> to vector<1x2x1xf32>
    %89 = vector.shape_cast %88 : vector<1x2x1xf32> to vector<2x1xf32>
    %90 = vector.shape_cast %89 : vector<2x1xf32> to vector<2x1xf32>
    %91 = vector.broadcast %90 : vector<2x1xf32> to vector<2x64xf32>
    %92 = vector.extract_strided_slice %10 {offsets = [2, 0, 0], sizes = [1, 2, 1], strides = [1, 1, 1]} : vector<8x2x1xf32> to vector<1x2x1xf32>
    %93 = vector.shape_cast %92 : vector<1x2x1xf32> to vector<2x1xf32>
    %94 = vector.shape_cast %93 : vector<2x1xf32> to vector<2x1xf32>
    %95 = vector.broadcast %94 : vector<2x1xf32> to vector<2x64xf32>
    %96 = vector.shape_cast %32 : vector<1x64xi1> to vector<1x64xi1>
    %97 = vector.broadcast %96 : vector<1x64xi1> to vector<2x64xi1>
    %98 = arith.select %97, %91, %95 : vector<2x64xi1>, vector<2x64xf32>
    %99 = vector.extract_strided_slice %10 {offsets = [6, 0, 0], sizes = [1, 2, 1], strides = [1, 1, 1]} : vector<8x2x1xf32> to vector<1x2x1xf32>
    %100 = vector.shape_cast %99 : vector<1x2x1xf32> to vector<2x1xf32>
    %101 = vector.shape_cast %100 : vector<2x1xf32> to vector<2x1xf32>
    %102 = vector.broadcast %101 : vector<2x1xf32> to vector<2x64xf32>
    %103 = vector.extract_strided_slice %10 {offsets = [1, 0, 0], sizes = [1, 2, 1], strides = [1, 1, 1]} : vector<8x2x1xf32> to vector<1x2x1xf32>
    %104 = vector.shape_cast %103 : vector<1x2x1xf32> to vector<2x1xf32>
    %105 = vector.shape_cast %104 : vector<2x1xf32> to vector<2x1xf32>
    %106 = vector.broadcast %105 : vector<2x1xf32> to vector<2x64xf32>
    %107 = vector.shape_cast %32 : vector<1x64xi1> to vector<1x64xi1>
    %108 = vector.broadcast %107 : vector<1x64xi1> to vector<2x64xi1>
    %109 = arith.select %108, %102, %106 : vector<2x64xi1>, vector<2x64xf32>
    %110 = vector.extract_strided_slice %10 {offsets = [7, 0, 0], sizes = [1, 2, 1], strides = [1, 1, 1]} : vector<8x2x1xf32> to vector<1x2x1xf32>
    %111 = vector.shape_cast %110 : vector<1x2x1xf32> to vector<2x1xf32>
    %112 = vector.shape_cast %111 : vector<2x1xf32> to vector<2x1xf32>
    %113 = vector.broadcast %112 : vector<2x1xf32> to vector<2x64xf32>
    %114 = vector.extract_strided_slice %10 {offsets = [0, 0, 0], sizes = [1, 2, 1], strides = [1, 1, 1]} : vector<8x2x1xf32> to vector<1x2x1xf32>
    %115 = vector.shape_cast %114 : vector<1x2x1xf32> to vector<2x1xf32>
    %116 = vector.shape_cast %115 : vector<2x1xf32> to vector<2x1xf32>
    %117 = vector.broadcast %116 : vector<2x1xf32> to vector<2x64xf32>
    %118 = vector.shape_cast %32 : vector<1x64xi1> to vector<1x64xi1>
    %119 = vector.broadcast %118 : vector<1x64xi1> to vector<2x64xi1>
    %120 = arith.select %119, %113, %117 : vector<2x64xi1>, vector<2x64xf32>
    %c0_15 = arith.constant 0 : index
    %c0_16 = arith.constant 0 : index
    %121 = vector.load %arg5[%c0_15, %c0_16] : memref<64x192xbf16, #tpu.memory_space<vmem>>, vector<64x192xbf16>
    %c0_17 = arith.constant 0 : index
    %c0_18 = arith.constant 0 : index
    %122 = vector.load %arg6[%c0_17, %c0_18] : memref<2x192xf32, #tpu.memory_space<vmem>>, vector<1x192xf32>
    %c1 = arith.constant 1 : index
    %c0_19 = arith.constant 0 : index
    %123 = vector.load %arg6[%c1, %c0_19] : memref<2x192xf32, #tpu.memory_space<vmem>>, vector<1x192xf32>
    %124 = arith.truncf %9 : vector<8x2x32xf32> to vector<8x2x32xbf16>
    %c0_20 = arith.constant 0 : index
    %c0_21 = arith.constant 0 : index
    %125 = vector.load %arg4[%c0_20, %c0_21] : memref<32x192xbf16, #tpu.memory_space<vmem>>, vector<32x192xbf16>
    "tpu.trace_start"() <{level = 10 : i32, message = "tbi,ik->tbk"}> : () -> ()
    %cst_22 = arith.constant dense<0.000000e+00> : vector<8x2x192xf32>
    %126 = tpu.matmul %124, %125, %cst_22 {dimension_numbers = #tpu.dot_dimension_numbers<[2], [0], [0, 1], [1], [0, 0, 0, 1, 1, 1], [], []>} : vector<8x2x32xbf16>, vector<32x192xbf16>, vector<8x2x192xf32> -> vector<8x2x192xf32>
    "tpu.trace_stop"() : () -> ()
    %127 = vector.shape_cast %122 : vector<1x192xf32> to vector<1x1x192xf32>
    %128 = vector.broadcast %127 : vector<1x1x192xf32> to vector<8x2x192xf32>
    %129 = arith.addf %126, %128 : vector<8x2x192xf32>
    %cst_23 = arith.constant 0.000000e+00 : f32
    %130 = vector.broadcast %cst_23 : f32 to vector<2x64xf32>
    %131 = vector.extract_strided_slice %129 {offsets = [0, 0, 0], sizes = [1, 2, 192], strides = [1, 1, 1]} : vector<8x2x192xf32> to vector<1x2x192xf32>
    %132 = vector.shape_cast %131 : vector<1x2x192xf32> to vector<2x192xf32>
    %133 = vector.extract_strided_slice %129 {offsets = [7, 0, 0], sizes = [1, 2, 192], strides = [1, 1, 1]} : vector<8x2x192xf32> to vector<1x2x192xf32>
    %134 = vector.shape_cast %133 : vector<1x2x192xf32> to vector<2x192xf32>
    %135 = vector.shape_cast %29 : vector<1x192xi1> to vector<1x192xi1>
    %136 = vector.broadcast %135 : vector<1x192xi1> to vector<2x192xi1>
    %137 = arith.select %136, %132, %134 : vector<2x192xi1>, vector<2x192xf32>
    %138 = arith.truncf %130 : vector<2x64xf32> to vector<2x64xbf16>
    %cst_24 = arith.constant dense<0.000000e+00> : vector<2x192xf32>
    %139 = tpu.matmul %138, %121, %cst_24 {dimension_numbers = #tpu.dot_dimension_numbers<[1], [0], [0], [1], [0, 0, 1, 1], [], []>} : vector<2x64xbf16>, vector<64x192xbf16>, vector<2x192xf32> -> vector<2x192xf32>
    %140 = vector.broadcast %123 : vector<1x192xf32> to vector<2x192xf32>
    %141 = arith.addf %139, %140 : vector<2x192xf32>
    %142 = vector.extract_strided_slice %137 {offsets = [0, 0], sizes = [2, 128], strides = [1, 1]} : vector<2x192xf32> to vector<2x128xf32>
    %143 = vector.extract_strided_slice %141 {offsets = [0, 0], sizes = [2, 128], strides = [1, 1]} : vector<2x192xf32> to vector<2x128xf32>
    %144 = arith.addf %142, %143 : vector<2x128xf32>
    %145 = arith.negf %144 : vector<2x128xf32>
    %146 = math.exp %145 : vector<2x128xf32>
    %cst_25 = arith.constant 1.000000e+00 : f32
    %147 = vector.broadcast %cst_25 : f32 to vector<2x128xf32>
    %148 = arith.addf %147, %146 : vector<2x128xf32>
    %149 = arith.divf %147, %148 : vector<2x128xf32>
    %150 = vector.extract_strided_slice %149 {offsets = [0, 0], sizes = [2, 64], strides = [1, 1]} : vector<2x128xf32> to vector<2x64xf32>
    %151 = vector.extract_strided_slice %149 {offsets = [0, 64], sizes = [2, 64], strides = [1, 1]} : vector<2x128xf32> to vector<2x64xf32>
    %152 = vector.extract_strided_slice %137 {offsets = [0, 128], sizes = [2, 64], strides = [1, 1]} : vector<2x192xf32> to vector<2x64xf32>
    %153 = vector.extract_strided_slice %141 {offsets = [0, 128], sizes = [2, 64], strides = [1, 1]} : vector<2x192xf32> to vector<2x64xf32>
    %154 = arith.mulf %150, %153 : vector<2x64xf32>
    %155 = arith.addf %152, %154 : vector<2x64xf32>
    %156 = math.tanh %155 : vector<2x64xf32>
    %cst_26 = arith.constant 1.000000e+00 : f32
    %157 = vector.broadcast %cst_26 : f32 to vector<2x64xf32>
    %158 = arith.subf %157, %151 : vector<2x64xf32>
    %159 = arith.mulf %158, %156 : vector<2x64xf32>
    %160 = arith.mulf %151, %130 : vector<2x64xf32>
    %161 = arith.addf %159, %160 : vector<2x64xf32>
    %162 = arith.mulf %43, %161 : vector<2x64xf32>
    %163 = arith.mulf %43, %130 : vector<2x64xf32>
    %164 = arith.subf %130, %163 : vector<2x64xf32>
    %165 = arith.addf %162, %164 : vector<2x64xf32>
    %166 = vector.extract_strided_slice %129 {offsets = [1, 0, 0], sizes = [1, 2, 192], strides = [1, 1, 1]} : vector<8x2x192xf32> to vector<1x2x192xf32>
    %167 = vector.shape_cast %166 : vector<1x2x192xf32> to vector<2x192xf32>
    %168 = vector.extract_strided_slice %129 {offsets = [6, 0, 0], sizes = [1, 2, 192], strides = [1, 1, 1]} : vector<8x2x192xf32> to vector<1x2x192xf32>
    %169 = vector.shape_cast %168 : vector<1x2x192xf32> to vector<2x192xf32>
    %170 = vector.shape_cast %29 : vector<1x192xi1> to vector<1x192xi1>
    %171 = vector.broadcast %170 : vector<1x192xi1> to vector<2x192xi1>
    %172 = arith.select %171, %167, %169 : vector<2x192xi1>, vector<2x192xf32>
    %173 = arith.truncf %165 : vector<2x64xf32> to vector<2x64xbf16>
    %cst_27 = arith.constant dense<0.000000e+00> : vector<2x192xf32>
    %174 = tpu.matmul %173, %121, %cst_27 {dimension_numbers = #tpu.dot_dimension_numbers<[1], [0], [0], [1], [0, 0, 1, 1], [], []>} : vector<2x64xbf16>, vector<64x192xbf16>, vector<2x192xf32> -> vector<2x192xf32>
    %175 = vector.broadcast %123 : vector<1x192xf32> to vector<2x192xf32>
    %176 = arith.addf %174, %175 : vector<2x192xf32>
    %177 = vector.extract_strided_slice %172 {offsets = [0, 0], sizes = [2, 128], strides = [1, 1]} : vector<2x192xf32> to vector<2x128xf32>
    %178 = vector.extract_strided_slice %176 {offsets = [0, 0], sizes = [2, 128], strides = [1, 1]} : vector<2x192xf32> to vector<2x128xf32>
    %179 = arith.addf %177, %178 : vector<2x128xf32>
    %180 = arith.negf %179 : vector<2x128xf32>
    %181 = math.exp %180 : vector<2x128xf32>
    %cst_28 = arith.constant 1.000000e+00 : f32
    %182 = vector.broadcast %cst_28 : f32 to vector<2x128xf32>
    %183 = arith.addf %182, %181 : vector<2x128xf32>
    %184 = arith.divf %182, %183 : vector<2x128xf32>
    %185 = vector.extract_strided_slice %184 {offsets = [0, 0], sizes = [2, 64], strides = [1, 1]} : vector<2x128xf32> to vector<2x64xf32>
    %186 = vector.extract_strided_slice %184 {offsets = [0, 64], sizes = [2, 64], strides = [1, 1]} : vector<2x128xf32> to vector<2x64xf32>
    %187 = vector.extract_strided_slice %172 {offsets = [0, 128], sizes = [2, 64], strides = [1, 1]} : vector<2x192xf32> to vector<2x64xf32>
    %188 = vector.extract_strided_slice %176 {offsets = [0, 128], sizes = [2, 64], strides = [1, 1]} : vector<2x192xf32> to vector<2x64xf32>
    %189 = arith.mulf %185, %188 : vector<2x64xf32>
    %190 = arith.addf %187, %189 : vector<2x64xf32>
    %191 = math.tanh %190 : vector<2x64xf32>
    %cst_29 = arith.constant 1.000000e+00 : f32
    %192 = vector.broadcast %cst_29 : f32 to vector<2x64xf32>
    %193 = arith.subf %192, %186 : vector<2x64xf32>
    %194 = arith.mulf %193, %191 : vector<2x64xf32>
    %195 = arith.mulf %186, %165 : vector<2x64xf32>
    %196 = arith.addf %194, %195 : vector<2x64xf32>
    %197 = arith.mulf %54, %196 : vector<2x64xf32>
    %198 = arith.mulf %54, %165 : vector<2x64xf32>
    %199 = arith.subf %165, %198 : vector<2x64xf32>
    %200 = arith.addf %197, %199 : vector<2x64xf32>
    %201 = vector.extract_strided_slice %129 {offsets = [2, 0, 0], sizes = [1, 2, 192], strides = [1, 1, 1]} : vector<8x2x192xf32> to vector<1x2x192xf32>
    %202 = vector.shape_cast %201 : vector<1x2x192xf32> to vector<2x192xf32>
    %203 = vector.extract_strided_slice %129 {offsets = [5, 0, 0], sizes = [1, 2, 192], strides = [1, 1, 1]} : vector<8x2x192xf32> to vector<1x2x192xf32>
    %204 = vector.shape_cast %203 : vector<1x2x192xf32> to vector<2x192xf32>
    %205 = vector.shape_cast %29 : vector<1x192xi1> to vector<1x192xi1>
    %206 = vector.broadcast %205 : vector<1x192xi1> to vector<2x192xi1>
    %207 = arith.select %206, %202, %204 : vector<2x192xi1>, vector<2x192xf32>
    %208 = arith.truncf %200 : vector<2x64xf32> to vector<2x64xbf16>
    %cst_30 = arith.constant dense<0.000000e+00> : vector<2x192xf32>
    %209 = tpu.matmul %208, %121, %cst_30 {dimension_numbers = #tpu.dot_dimension_numbers<[1], [0], [0], [1], [0, 0, 1, 1], [], []>} : vector<2x64xbf16>, vector<64x192xbf16>, vector<2x192xf32> -> vector<2x192xf32>
    %210 = vector.broadcast %123 : vector<1x192xf32> to vector<2x192xf32>
    %211 = arith.addf %209, %210 : vector<2x192xf32>
    %212 = vector.extract_strided_slice %207 {offsets = [0, 0], sizes = [2, 128], strides = [1, 1]} : vector<2x192xf32> to vector<2x128xf32>
    %213 = vector.extract_strided_slice %211 {offsets = [0, 0], sizes = [2, 128], strides = [1, 1]} : vector<2x192xf32> to vector<2x128xf32>
    %214 = arith.addf %212, %213 : vector<2x128xf32>
    %215 = arith.negf %214 : vector<2x128xf32>
    %216 = math.exp %215 : vector<2x128xf32>
    %cst_31 = arith.constant 1.000000e+00 : f32
    %217 = vector.broadcast %cst_31 : f32 to vector<2x128xf32>
    %218 = arith.addf %217, %216 : vector<2x128xf32>
    %219 = arith.divf %217, %218 : vector<2x128xf32>
    %220 = vector.extract_strided_slice %219 {offsets = [0, 0], sizes = [2, 64], strides = [1, 1]} : vector<2x128xf32> to vector<2x64xf32>
    %221 = vector.extract_strided_slice %219 {offsets = [0, 64], sizes = [2, 64], strides = [1, 1]} : vector<2x128xf32> to vector<2x64xf32>
    %222 = vector.extract_strided_slice %207 {offsets = [0, 128], sizes = [2, 64], strides = [1, 1]} : vector<2x192xf32> to vector<2x64xf32>
    %223 = vector.extract_strided_slice %211 {offsets = [0, 128], sizes = [2, 64], strides = [1, 1]} : vector<2x192xf32> to vector<2x64xf32>
    %224 = arith.mulf %220, %223 : vector<2x64xf32>
    %225 = arith.addf %222, %224 : vector<2x64xf32>
    %226 = math.tanh %225 : vector<2x64xf32>
    %cst_32 = arith.constant 1.000000e+00 : f32
    %227 = vector.broadcast %cst_32 : f32 to vector<2x64xf32>
    %228 = arith.subf %227, %221 : vector<2x64xf32>
    %229 = arith.mulf %228, %226 : vector<2x64xf32>
    %230 = arith.mulf %221, %200 : vector<2x64xf32>
    %231 = arith.addf %229, %230 : vector<2x64xf32>
    %232 = arith.mulf %65, %231 : vector<2x64xf32>
    %233 = arith.mulf %65, %200 : vector<2x64xf32>
    %234 = arith.subf %200, %233 : vector<2x64xf32>
    %235 = arith.addf %232, %234 : vector<2x64xf32>
    %236 = vector.extract_strided_slice %129 {offsets = [3, 0, 0], sizes = [1, 2, 192], strides = [1, 1, 1]} : vector<8x2x192xf32> to vector<1x2x192xf32>
    %237 = vector.shape_cast %236 : vector<1x2x192xf32> to vector<2x192xf32>
    %238 = vector.extract_strided_slice %129 {offsets = [4, 0, 0], sizes = [1, 2, 192], strides = [1, 1, 1]} : vector<8x2x192xf32> to vector<1x2x192xf32>
    %239 = vector.shape_cast %238 : vector<1x2x192xf32> to vector<2x192xf32>
    %240 = vector.shape_cast %29 : vector<1x192xi1> to vector<1x192xi1>
    %241 = vector.broadcast %240 : vector<1x192xi1> to vector<2x192xi1>
    %242 = arith.select %241, %237, %239 : vector<2x192xi1>, vector<2x192xf32>
    %243 = arith.truncf %235 : vector<2x64xf32> to vector<2x64xbf16>
    %cst_33 = arith.constant dense<0.000000e+00> : vector<2x192xf32>
    %244 = tpu.matmul %243, %121, %cst_33 {dimension_numbers = #tpu.dot_dimension_numbers<[1], [0], [0], [1], [0, 0, 1, 1], [], []>} : vector<2x64xbf16>, vector<64x192xbf16>, vector<2x192xf32> -> vector<2x192xf32>
    %245 = vector.broadcast %123 : vector<1x192xf32> to vector<2x192xf32>
    %246 = arith.addf %244, %245 : vector<2x192xf32>
    %247 = vector.extract_strided_slice %242 {offsets = [0, 0], sizes = [2, 128], strides = [1, 1]} : vector<2x192xf32> to vector<2x128xf32>
    %248 = vector.extract_strided_slice %246 {offsets = [0, 0], sizes = [2, 128], strides = [1, 1]} : vector<2x192xf32> to vector<2x128xf32>
    %249 = arith.addf %247, %248 : vector<2x128xf32>
    %250 = arith.negf %249 : vector<2x128xf32>
    %251 = math.exp %250 : vector<2x128xf32>
    %cst_34 = arith.constant 1.000000e+00 : f32
    %252 = vector.broadcast %cst_34 : f32 to vector<2x128xf32>
    %253 = arith.addf %252, %251 : vector<2x128xf32>
    %254 = arith.divf %252, %253 : vector<2x128xf32>
    %255 = vector.extract_strided_slice %254 {offsets = [0, 0], sizes = [2, 64], strides = [1, 1]} : vector<2x128xf32> to vector<2x64xf32>
    %256 = vector.extract_strided_slice %254 {offsets = [0, 64], sizes = [2, 64], strides = [1, 1]} : vector<2x128xf32> to vector<2x64xf32>
    %257 = vector.extract_strided_slice %242 {offsets = [0, 128], sizes = [2, 64], strides = [1, 1]} : vector<2x192xf32> to vector<2x64xf32>
    %258 = vector.extract_strided_slice %246 {offsets = [0, 128], sizes = [2, 64], strides = [1, 1]} : vector<2x192xf32> to vector<2x64xf32>
    %259 = arith.mulf %255, %258 : vector<2x64xf32>
    %260 = arith.addf %257, %259 : vector<2x64xf32>
    %261 = math.tanh %260 : vector<2x64xf32>
    %cst_35 = arith.constant 1.000000e+00 : f32
    %262 = vector.broadcast %cst_35 : f32 to vector<2x64xf32>
    %263 = arith.subf %262, %256 : vector<2x64xf32>
    %264 = arith.mulf %263, %261 : vector<2x64xf32>
    %265 = arith.mulf %256, %235 : vector<2x64xf32>
    %266 = arith.addf %264, %265 : vector<2x64xf32>
    %267 = arith.mulf %76, %266 : vector<2x64xf32>
    %268 = arith.mulf %76, %235 : vector<2x64xf32>
    %269 = arith.subf %235, %268 : vector<2x64xf32>
    %270 = arith.addf %267, %269 : vector<2x64xf32>
    %271 = vector.extract_strided_slice %129 {offsets = [4, 0, 0], sizes = [1, 2, 192], strides = [1, 1, 1]} : vector<8x2x192xf32> to vector<1x2x192xf32>
    %272 = vector.shape_cast %271 : vector<1x2x192xf32> to vector<2x192xf32>
    %273 = vector.extract_strided_slice %129 {offsets = [3, 0, 0], sizes = [1, 2, 192], strides = [1, 1, 1]} : vector<8x2x192xf32> to vector<1x2x192xf32>
    %274 = vector.shape_cast %273 : vector<1x2x192xf32> to vector<2x192xf32>
    %275 = vector.shape_cast %29 : vector<1x192xi1> to vector<1x192xi1>
    %276 = vector.broadcast %275 : vector<1x192xi1> to vector<2x192xi1>
    %277 = arith.select %276, %272, %274 : vector<2x192xi1>, vector<2x192xf32>
    %278 = arith.truncf %270 : vector<2x64xf32> to vector<2x64xbf16>
    %cst_36 = arith.constant dense<0.000000e+00> : vector<2x192xf32>
    %279 = tpu.matmul %278, %121, %cst_36 {dimension_numbers = #tpu.dot_dimension_numbers<[1], [0], [0], [1], [0, 0, 1, 1], [], []>} : vector<2x64xbf16>, vector<64x192xbf16>, vector<2x192xf32> -> vector<2x192xf32>
    %280 = vector.broadcast %123 : vector<1x192xf32> to vector<2x192xf32>
    %281 = arith.addf %279, %280 : vector<2x192xf32>
    %282 = vector.extract_strided_slice %277 {offsets = [0, 0], sizes = [2, 128], strides = [1, 1]} : vector<2x192xf32> to vector<2x128xf32>
    %283 = vector.extract_strided_slice %281 {offsets = [0, 0], sizes = [2, 128], strides = [1, 1]} : vector<2x192xf32> to vector<2x128xf32>
    %284 = arith.addf %282, %283 : vector<2x128xf32>
    %285 = arith.negf %284 : vector<2x128xf32>
    %286 = math.exp %285 : vector<2x128xf32>
    %cst_37 = arith.constant 1.000000e+00 : f32
    %287 = vector.broadcast %cst_37 : f32 to vector<2x128xf32>
    %288 = arith.addf %287, %286 : vector<2x128xf32>
    %289 = arith.divf %287, %288 : vector<2x128xf32>
    %290 = vector.extract_strided_slice %289 {offsets = [0, 0], sizes = [2, 64], strides = [1, 1]} : vector<2x128xf32> to vector<2x64xf32>
    %291 = vector.extract_strided_slice %289 {offsets = [0, 64], sizes = [2, 64], strides = [1, 1]} : vector<2x128xf32> to vector<2x64xf32>
    %292 = vector.extract_strided_slice %277 {offsets = [0, 128], sizes = [2, 64], strides = [1, 1]} : vector<2x192xf32> to vector<2x64xf32>
    %293 = vector.extract_strided_slice %281 {offsets = [0, 128], sizes = [2, 64], strides = [1, 1]} : vector<2x192xf32> to vector<2x64xf32>
    %294 = arith.mulf %290, %293 : vector<2x64xf32>
    %295 = arith.addf %292, %294 : vector<2x64xf32>
    %296 = math.tanh %295 : vector<2x64xf32>
    %cst_38 = arith.constant 1.000000e+00 : f32
    %297 = vector.broadcast %cst_38 : f32 to vector<2x64xf32>
    %298 = arith.subf %297, %291 : vector<2x64xf32>
    %299 = arith.mulf %298, %296 : vector<2x64xf32>
    %300 = arith.mulf %291, %270 : vector<2x64xf32>
    %301 = arith.addf %299, %300 : vector<2x64xf32>
    %302 = arith.mulf %87, %301 : vector<2x64xf32>
    %303 = arith.mulf %87, %270 : vector<2x64xf32>
    %304 = arith.subf %270, %303 : vector<2x64xf32>
    %305 = arith.addf %302, %304 : vector<2x64xf32>
    %306 = vector.extract_strided_slice %129 {offsets = [5, 0, 0], sizes = [1, 2, 192], strides = [1, 1, 1]} : vector<8x2x192xf32> to vector<1x2x192xf32>
    %307 = vector.shape_cast %306 : vector<1x2x192xf32> to vector<2x192xf32>
    %308 = vector.extract_strided_slice %129 {offsets = [2, 0, 0], sizes = [1, 2, 192], strides = [1, 1, 1]} : vector<8x2x192xf32> to vector<1x2x192xf32>
    %309 = vector.shape_cast %308 : vector<1x2x192xf32> to vector<2x192xf32>
    %310 = vector.shape_cast %29 : vector<1x192xi1> to vector<1x192xi1>
    %311 = vector.broadcast %310 : vector<1x192xi1> to vector<2x192xi1>
    %312 = arith.select %311, %307, %309 : vector<2x192xi1>, vector<2x192xf32>
    %313 = arith.truncf %305 : vector<2x64xf32> to vector<2x64xbf16>
    %cst_39 = arith.constant dense<0.000000e+00> : vector<2x192xf32>
    %314 = tpu.matmul %313, %121, %cst_39 {dimension_numbers = #tpu.dot_dimension_numbers<[1], [0], [0], [1], [0, 0, 1, 1], [], []>} : vector<2x64xbf16>, vector<64x192xbf16>, vector<2x192xf32> -> vector<2x192xf32>
    %315 = vector.broadcast %123 : vector<1x192xf32> to vector<2x192xf32>
    %316 = arith.addf %314, %315 : vector<2x192xf32>
    %317 = vector.extract_strided_slice %312 {offsets = [0, 0], sizes = [2, 128], strides = [1, 1]} : vector<2x192xf32> to vector<2x128xf32>
    %318 = vector.extract_strided_slice %316 {offsets = [0, 0], sizes = [2, 128], strides = [1, 1]} : vector<2x192xf32> to vector<2x128xf32>
    %319 = arith.addf %317, %318 : vector<2x128xf32>
    %320 = arith.negf %319 : vector<2x128xf32>
    %321 = math.exp %320 : vector<2x128xf32>
    %cst_40 = arith.constant 1.000000e+00 : f32
    %322 = vector.broadcast %cst_40 : f32 to vector<2x128xf32>
    %323 = arith.addf %322, %321 : vector<2x128xf32>
    %324 = arith.divf %322, %323 : vector<2x128xf32>
    %325 = vector.extract_strided_slice %324 {offsets = [0, 0], sizes = [2, 64], strides = [1, 1]} : vector<2x128xf32> to vector<2x64xf32>
    %326 = vector.extract_strided_slice %324 {offsets = [0, 64], sizes = [2, 64], strides = [1, 1]} : vector<2x128xf32> to vector<2x64xf32>
    %327 = vector.extract_strided_slice %312 {offsets = [0, 128], sizes = [2, 64], strides = [1, 1]} : vector<2x192xf32> to vector<2x64xf32>
    %328 = vector.extract_strided_slice %316 {offsets = [0, 128], sizes = [2, 64], strides = [1, 1]} : vector<2x192xf32> to vector<2x64xf32>
    %329 = arith.mulf %325, %328 : vector<2x64xf32>
    %330 = arith.addf %327, %329 : vector<2x64xf32>
    %331 = math.tanh %330 : vector<2x64xf32>
    %cst_41 = arith.constant 1.000000e+00 : f32
    %332 = vector.broadcast %cst_41 : f32 to vector<2x64xf32>
    %333 = arith.subf %332, %326 : vector<2x64xf32>
    %334 = arith.mulf %333, %331 : vector<2x64xf32>
    %335 = arith.mulf %326, %305 : vector<2x64xf32>
    %336 = arith.addf %334, %335 : vector<2x64xf32>
    %337 = arith.mulf %98, %336 : vector<2x64xf32>
    %338 = arith.mulf %98, %305 : vector<2x64xf32>
    %339 = arith.subf %305, %338 : vector<2x64xf32>
    %340 = arith.addf %337, %339 : vector<2x64xf32>
    %341 = vector.extract_strided_slice %129 {offsets = [6, 0, 0], sizes = [1, 2, 192], strides = [1, 1, 1]} : vector<8x2x192xf32> to vector<1x2x192xf32>
    %342 = vector.shape_cast %341 : vector<1x2x192xf32> to vector<2x192xf32>
    %343 = vector.extract_strided_slice %129 {offsets = [1, 0, 0], sizes = [1, 2, 192], strides = [1, 1, 1]} : vector<8x2x192xf32> to vector<1x2x192xf32>
    %344 = vector.shape_cast %343 : vector<1x2x192xf32> to vector<2x192xf32>
    %345 = vector.shape_cast %29 : vector<1x192xi1> to vector<1x192xi1>
    %346 = vector.broadcast %345 : vector<1x192xi1> to vector<2x192xi1>
    %347 = arith.select %346, %342, %344 : vector<2x192xi1>, vector<2x192xf32>
    %348 = arith.truncf %340 : vector<2x64xf32> to vector<2x64xbf16>
    %cst_42 = arith.constant dense<0.000000e+00> : vector<2x192xf32>
    %349 = tpu.matmul %348, %121, %cst_42 {dimension_numbers = #tpu.dot_dimension_numbers<[1], [0], [0], [1], [0, 0, 1, 1], [], []>} : vector<2x64xbf16>, vector<64x192xbf16>, vector<2x192xf32> -> vector<2x192xf32>
    %350 = vector.broadcast %123 : vector<1x192xf32> to vector<2x192xf32>
    %351 = arith.addf %349, %350 : vector<2x192xf32>
    %352 = vector.extract_strided_slice %347 {offsets = [0, 0], sizes = [2, 128], strides = [1, 1]} : vector<2x192xf32> to vector<2x128xf32>
    %353 = vector.extract_strided_slice %351 {offsets = [0, 0], sizes = [2, 128], strides = [1, 1]} : vector<2x192xf32> to vector<2x128xf32>
    %354 = arith.addf %352, %353 : vector<2x128xf32>
    %355 = arith.negf %354 : vector<2x128xf32>
    %356 = math.exp %355 : vector<2x128xf32>
    %cst_43 = arith.constant 1.000000e+00 : f32
    %357 = vector.broadcast %cst_43 : f32 to vector<2x128xf32>
    %358 = arith.addf %357, %356 : vector<2x128xf32>
    %359 = arith.divf %357, %358 : vector<2x128xf32>
    %360 = vector.extract_strided_slice %359 {offsets = [0, 0], sizes = [2, 64], strides = [1, 1]} : vector<2x128xf32> to vector<2x64xf32>
    %361 = vector.extract_strided_slice %359 {offsets = [0, 64], sizes = [2, 64], strides = [1, 1]} : vector<2x128xf32> to vector<2x64xf32>
    %362 = vector.extract_strided_slice %347 {offsets = [0, 128], sizes = [2, 64], strides = [1, 1]} : vector<2x192xf32> to vector<2x64xf32>
    %363 = vector.extract_strided_slice %351 {offsets = [0, 128], sizes = [2, 64], strides = [1, 1]} : vector<2x192xf32> to vector<2x64xf32>
    %364 = arith.mulf %360, %363 : vector<2x64xf32>
    %365 = arith.addf %362, %364 : vector<2x64xf32>
    %366 = math.tanh %365 : vector<2x64xf32>
    %cst_44 = arith.constant 1.000000e+00 : f32
    %367 = vector.broadcast %cst_44 : f32 to vector<2x64xf32>
    %368 = arith.subf %367, %361 : vector<2x64xf32>
    %369 = arith.mulf %368, %366 : vector<2x64xf32>
    %370 = arith.mulf %361, %340 : vector<2x64xf32>
    %371 = arith.addf %369, %370 : vector<2x64xf32>
    %372 = arith.mulf %109, %371 : vector<2x64xf32>
    %373 = arith.mulf %109, %340 : vector<2x64xf32>
    %374 = arith.subf %340, %373 : vector<2x64xf32>
    %375 = arith.addf %372, %374 : vector<2x64xf32>
    %376 = vector.extract_strided_slice %129 {offsets = [7, 0, 0], sizes = [1, 2, 192], strides = [1, 1, 1]} : vector<8x2x192xf32> to vector<1x2x192xf32>
    %377 = vector.shape_cast %376 : vector<1x2x192xf32> to vector<2x192xf32>
    %378 = vector.extract_strided_slice %129 {offsets = [0, 0, 0], sizes = [1, 2, 192], strides = [1, 1, 1]} : vector<8x2x192xf32> to vector<1x2x192xf32>
    %379 = vector.shape_cast %378 : vector<1x2x192xf32> to vector<2x192xf32>
    %380 = vector.shape_cast %29 : vector<1x192xi1> to vector<1x192xi1>
    %381 = vector.broadcast %380 : vector<1x192xi1> to vector<2x192xi1>
    %382 = arith.select %381, %377, %379 : vector<2x192xi1>, vector<2x192xf32>
    %383 = arith.truncf %375 : vector<2x64xf32> to vector<2x64xbf16>
    %cst_45 = arith.constant dense<0.000000e+00> : vector<2x192xf32>
    %384 = tpu.matmul %383, %121, %cst_45 {dimension_numbers = #tpu.dot_dimension_numbers<[1], [0], [0], [1], [0, 0, 1, 1], [], []>} : vector<2x64xbf16>, vector<64x192xbf16>, vector<2x192xf32> -> vector<2x192xf32>
    %385 = vector.broadcast %123 : vector<1x192xf32> to vector<2x192xf32>
    %386 = arith.addf %384, %385 : vector<2x192xf32>
    %387 = vector.extract_strided_slice %382 {offsets = [0, 0], sizes = [2, 128], strides = [1, 1]} : vector<2x192xf32> to vector<2x128xf32>
    %388 = vector.extract_strided_slice %386 {offsets = [0, 0], sizes = [2, 128], strides = [1, 1]} : vector<2x192xf32> to vector<2x128xf32>
    %389 = arith.addf %387, %388 : vector<2x128xf32>
    %390 = arith.negf %389 : vector<2x128xf32>
    %391 = math.exp %390 : vector<2x128xf32>
    %cst_46 = arith.constant 1.000000e+00 : f32
    %392 = vector.broadcast %cst_46 : f32 to vector<2x128xf32>
    %393 = arith.addf %392, %391 : vector<2x128xf32>
    %394 = arith.divf %392, %393 : vector<2x128xf32>
    %395 = vector.extract_strided_slice %394 {offsets = [0, 0], sizes = [2, 64], strides = [1, 1]} : vector<2x128xf32> to vector<2x64xf32>
    %396 = vector.extract_strided_slice %394 {offsets = [0, 64], sizes = [2, 64], strides = [1, 1]} : vector<2x128xf32> to vector<2x64xf32>
    %397 = vector.extract_strided_slice %382 {offsets = [0, 128], sizes = [2, 64], strides = [1, 1]} : vector<2x192xf32> to vector<2x64xf32>
    %398 = vector.extract_strided_slice %386 {offsets = [0, 128], sizes = [2, 64], strides = [1, 1]} : vector<2x192xf32> to vector<2x64xf32>
    %399 = arith.mulf %395, %398 : vector<2x64xf32>
    %400 = arith.addf %397, %399 : vector<2x64xf32>
    %401 = math.tanh %400 : vector<2x64xf32>
    %cst_47 = arith.constant 1.000000e+00 : f32
    %402 = vector.broadcast %cst_47 : f32 to vector<2x64xf32>
    %403 = arith.subf %402, %396 : vector<2x64xf32>
    %404 = arith.mulf %403, %401 : vector<2x64xf32>
    %405 = arith.mulf %396, %375 : vector<2x64xf32>
    %406 = arith.addf %404, %405 : vector<2x64xf32>
    %407 = arith.mulf %120, %406 : vector<2x64xf32>
    %408 = vector.shape_cast %32 : vector<1x64xi1> to vector<1x64xi1>
    %409 = vector.broadcast %408 : vector<1x64xi1> to vector<2x64xi1>
    %410 = arith.select %409, %162, %407 : vector<2x64xi1>, vector<2x64xf32>
    %411 = vector.shape_cast %32 : vector<1x64xi1> to vector<1x64xi1>
    %412 = vector.broadcast %411 : vector<1x64xi1> to vector<2x64xi1>
    %413 = arith.select %412, %197, %372 : vector<2x64xi1>, vector<2x64xf32>
    %414 = vector.shape_cast %32 : vector<1x64xi1> to vector<1x64xi1>
    %415 = vector.broadcast %414 : vector<1x64xi1> to vector<2x64xi1>
    %416 = arith.select %415, %232, %337 : vector<2x64xi1>, vector<2x64xf32>
    %417 = vector.shape_cast %32 : vector<1x64xi1> to vector<1x64xi1>
    %418 = vector.broadcast %417 : vector<1x64xi1> to vector<2x64xi1>
    %419 = arith.select %418, %267, %302 : vector<2x64xi1>, vector<2x64xf32>
    %420 = vector.shape_cast %32 : vector<1x64xi1> to vector<1x64xi1>
    %421 = vector.broadcast %420 : vector<1x64xi1> to vector<2x64xi1>
    %422 = arith.select %421, %302, %267 : vector<2x64xi1>, vector<2x64xf32>
    %423 = vector.shape_cast %32 : vector<1x64xi1> to vector<1x64xi1>
    %424 = vector.broadcast %423 : vector<1x64xi1> to vector<2x64xi1>
    %425 = arith.select %424, %337, %232 : vector<2x64xi1>, vector<2x64xf32>
    %426 = vector.shape_cast %32 : vector<1x64xi1> to vector<1x64xi1>
    %427 = vector.broadcast %426 : vector<1x64xi1> to vector<2x64xi1>
    %428 = arith.select %427, %372, %197 : vector<2x64xi1>, vector<2x64xf32>
    %429 = vector.shape_cast %32 : vector<1x64xi1> to vector<1x64xi1>
    %430 = vector.broadcast %429 : vector<1x64xi1> to vector<2x64xi1>
    %431 = arith.select %430, %407, %162 : vector<2x64xi1>, vector<2x64xf32>
    %432 = vector.shape_cast %410 : vector<2x64xf32> to vector<1x2x64xf32>
    %433 = vector.shape_cast %413 : vector<2x64xf32> to vector<1x2x64xf32>
    %434 = vector.shape_cast %416 : vector<2x64xf32> to vector<1x2x64xf32>
    %435 = vector.shape_cast %419 : vector<2x64xf32> to vector<1x2x64xf32>
    %436 = vector.shape_cast %422 : vector<2x64xf32> to vector<1x2x64xf32>
    %437 = vector.shape_cast %425 : vector<2x64xf32> to vector<1x2x64xf32>
    %438 = vector.shape_cast %428 : vector<2x64xf32> to vector<1x2x64xf32>
    %439 = vector.shape_cast %431 : vector<2x64xf32> to vector<1x2x64xf32>
    %440 = tpu.concatenate %432, %433, %434, %435, %436, %437, %438, %439 in 0 : vector<1x2x64xf32>, vector<1x2x64xf32>, vector<1x2x64xf32>, vector<1x2x64xf32>, vector<1x2x64xf32>, vector<1x2x64xf32>, vector<1x2x64xf32>, vector<1x2x64xf32> -> vector<8x2x64xf32>
    %c0_48 = arith.constant 0 : index
    %c0_49 = arith.constant 0 : index
    %441 = vector.load %arg9[%c0_48, %c0_49] : memref<4x32xf32, #tpu.memory_space<vmem>>, vector<1x32xf32>
    %c1_50 = arith.constant 1 : index
    %c0_51 = arith.constant 0 : index
    %442 = vector.load %arg9[%c1_50, %c0_51] : memref<4x32xf32, #tpu.memory_space<vmem>>, vector<1x32xf32>
    %c2 = arith.constant 2 : index
    %c0_52 = arith.constant 0 : index
    %443 = vector.load %arg9[%c2, %c0_52] : memref<4x32xf32, #tpu.memory_space<vmem>>, vector<1x32xf32>
    %c3 = arith.constant 3 : index
    %c0_53 = arith.constant 0 : index
    %444 = vector.load %arg9[%c3, %c0_53] : memref<4x32xf32, #tpu.memory_space<vmem>>, vector<1x1xf32>
    %445 = arith.truncf %440 : vector<8x2x64xf32> to vector<8x2x64xbf16>
    %c0_54 = arith.constant 0 : index
    %c0_55 = arith.constant 0 : index
    %446 = vector.load %arg7[%c0_54, %c0_55] : memref<64x32xbf16, #tpu.memory_space<vmem>>, vector<64x32xbf16>
    "tpu.trace_start"() <{level = 10 : i32, message = "tbh,hd->tbd"}> : () -> ()
    %cst_56 = arith.constant dense<0.000000e+00> : vector<8x2x32xf32>
    %447 = tpu.matmul %445, %446, %cst_56 {dimension_numbers = #tpu.dot_dimension_numbers<[2], [0], [0, 1], [1], [0, 0, 0, 1, 1, 1], [], []>} : vector<8x2x64xbf16>, vector<64x32xbf16>, vector<8x2x32xf32> -> vector<8x2x32xf32>
    "tpu.trace_stop"() : () -> ()
    %448 = vector.shape_cast %441 : vector<1x32xf32> to vector<1x1x32xf32>
    %449 = vector.broadcast %448 : vector<1x1x32xf32> to vector<8x2x32xf32>
    %450 = arith.addf %447, %449 : vector<8x2x32xf32>
    %cst_57 = arith.constant 0.000000e+00 : f32
    %451 = vector.broadcast %cst_57 : f32 to vector<8x2x32xf32>
    %452 = arith.maximumf %450, %451 : vector<8x2x32xf32>
    %453 = vector.broadcast %10 : vector<8x2x1xf32> to vector<8x2x32xf32>
    %454 = arith.mulf %452, %453 : vector<8x2x32xf32>
    %455 = vector.shape_cast %8 : vector<2x32xf32> to vector<1x2x32xf32>
    %456 = tpu.concatenate %454, %455 in 0 : vector<8x2x32xf32>, vector<1x2x32xf32> -> vector<9x2x32xf32>
    %457 = arith.truncf %456 : vector<9x2x32xf32> to vector<9x2x32xbf16>
    %c0_58 = arith.constant 0 : index
    %c0_59 = arith.constant 0 : index
    %458 = vector.load %arg8[%c0_58, %c0_59] : memref<32x32xbf16, #tpu.memory_space<vmem>>, vector<32x32xbf16>
    "tpu.trace_start"() <{level = 10 : i32, message = "tbd,dm->tbm"}> : () -> ()
    %cst_60 = arith.constant dense<0.000000e+00> : vector<9x2x32xf32>
    %459 = tpu.matmul %457, %458, %cst_60 {dimension_numbers = #tpu.dot_dimension_numbers<[2], [0], [0, 1], [1], [0, 0, 0, 1, 1, 1], [], []>} : vector<9x2x32xbf16>, vector<32x32xbf16>, vector<9x2x32xf32> -> vector<9x2x32xf32>
    "tpu.trace_stop"() : () -> ()
    %460 = vector.shape_cast %442 : vector<1x32xf32> to vector<1x1x32xf32>
    %461 = vector.broadcast %460 : vector<1x1x32xf32> to vector<9x2x32xf32>
    %462 = arith.addf %459, %461 : vector<9x2x32xf32>
    %463 = vector.shape_cast %443 : vector<1x32xf32> to vector<1x1x32xf32>
    %464 = vector.broadcast %463 : vector<1x1x32xf32> to vector<9x2x32xf32>
    %465 = arith.mulf %462, %464 : vector<9x2x32xf32>
    %cst_61 = arith.constant dense<0.000000e+00> : vector<9x2xf32>
    %466 = vector.multi_reduction <add>, %465, %cst_61 [2] : vector<9x2x32xf32> to vector<9x2xf32>
    %467 = vector.shape_cast %466 : vector<9x2xf32> to vector<9x2x1xf32>
    %468 = vector.shape_cast %444 : vector<1x1xf32> to vector<1x1x1xf32>
    %469 = vector.broadcast %468 : vector<1x1x1xf32> to vector<9x2x1xf32>
    %470 = arith.addf %467, %469 : vector<9x2x1xf32>
    %471 = vector.extract_strided_slice %462 {offsets = [0, 0, 0], sizes = [8, 2, 32], strides = [1, 1, 1]} : vector<9x2x32xf32> to vector<8x2x32xf32>
    %472 = vector.extract_strided_slice %462 {offsets = [8, 0, 0], sizes = [1, 2, 32], strides = [1, 1, 1]} : vector<9x2x32xf32> to vector<1x2x32xf32>
    %473 = vector.shape_cast %472 : vector<1x2x32xf32> to vector<2x32xf32>
    %474 = vector.extract_strided_slice %470 {offsets = [0, 0, 0], sizes = [8, 2, 1], strides = [1, 1, 1]} : vector<9x2x1xf32> to vector<8x2x1xf32>
    %475 = vector.extract_strided_slice %470 {offsets = [8, 0, 0], sizes = [1, 2, 1], strides = [1, 1, 1]} : vector<9x2x1xf32> to vector<1x2x1xf32>
    %476 = vector.shape_cast %475 : vector<1x2x1xf32> to vector<2x1xf32>
    %cst_62 = arith.constant dense<0xFF800000> : vector<2x1xf32>
    %477 = vector.multi_reduction <maximumf>, %474, %cst_62 [0] : vector<8x2x1xf32> to vector<2x1xf32>
    %478 = arith.maximumf %477, %476 : vector<2x1xf32>
    %479 = vector.shape_cast %478 : vector<2x1xf32> to vector<1x2x1xf32>
    %480 = vector.broadcast %479 : vector<1x2x1xf32> to vector<8x2x1xf32>
    %481 = arith.subf %474, %480 : vector<8x2x1xf32>
    %482 = math.exp %481 : vector<8x2x1xf32>
    %483 = arith.subf %476, %478 : vector<2x1xf32>
    %484 = math.exp %483 : vector<2x1xf32>
    %cst_63 = arith.constant dense<0.000000e+00> : vector<2x1xf32>
    %485 = vector.multi_reduction <add>, %482, %cst_63 [0] : vector<8x2x1xf32> to vector<2x1xf32>
    %486 = arith.addf %484, %485 : vector<2x1xf32>
    %487 = vector.broadcast %484 : vector<2x1xf32> to vector<2x32xf32>
    %488 = arith.mulf %487, %473 : vector<2x32xf32>
    %489 = vector.broadcast %482 : vector<8x2x1xf32> to vector<8x2x32xf32>
    %490 = arith.mulf %489, %471 : vector<8x2x32xf32>
    %cst_64 = arith.constant dense<0.000000e+00> : vector<2x32xf32>
    %491 = vector.multi_reduction <add>, %490, %cst_64 [0] : vector<8x2x32xf32> to vector<2x32xf32>
    %492 = arith.addf %488, %491 : vector<2x32xf32>
    %493 = vector.broadcast %486 : vector<2x1xf32> to vector<2x32xf32>
    %494 = arith.divf %492, %493 : vector<2x32xf32>
    %c0_65 = arith.constant 0 : index
    %c0_66 = arith.constant 0 : index
    %495 = vector.load %arg10[%c0_65, %c0_66] : memref<2x32xf32, #tpu.memory_space<vmem>>, vector<2x32xf32>
    tpu.vector_store %arg10[%c0_65, %c0_66], %494 {strides = array<i32>} : memref<2x32xf32, #tpu.memory_space<vmem>>, vector<2x32xf32>,
    return
  }
}

</mosaic_0001>

<llo_original>
// kernel: tpu_custom_call.1
$region0: #{tpu_custom_call.1}
  #allocation0 [shape = 'u32[]', space=smem, size = 0x4, offset = 0x4, fixed_abs, tag = 'smem constant byte address 0x4 - core index']
  #allocation1 [shape = 'u32[144,128]{1,0:T(1,128)}', space=vmem, size = 0x12000, scoped, tag = 'internal scratch']
  %s0 = inlined_call_operand.hbm [shape: bf16[9,2,48], index: 0, kind: input, shape index: {}]
  %s1 = inlined_call_operand.vmem [shape: f32[9,2,32], index: 1, kind: input, shape index: {}]
  %s2 = inlined_call_operand.vmem [shape: bf16[48,32], index: 2, kind: input, shape index: {}]
  %s3 = inlined_call_operand.vmem [shape: f32[8,2,1], index: 3, kind: input, shape index: {}]
  %s4 = inlined_call_operand.vmem [shape: bf16[32,192], index: 4, kind: input, shape index: {}]
  %s5 = inlined_call_operand.vmem [shape: bf16[64,192], index: 5, kind: input, shape index: {}]
  %s6 = inlined_call_operand.hbm [shape: f32[2,192], index: 6, kind: input, shape index: {}]
  %s7 = inlined_call_operand.vmem [shape: bf16[64,32], index: 7, kind: input, shape index: {}]
  %s8 = inlined_call_operand.hbm [shape: bf16[32,32], index: 8, kind: input, shape index: {}]
  %s9 = inlined_call_operand.vmem [shape: f32[4,32], index: 9, kind: input, shape index: {}]
  %s10 = inlined_call_operand.hbm [shape: f32[2,32], index: 10, kind: output, shape index: {}]
  %s11 = sld [smem:[#allocation0]]
  $region62: #{tpu_custom_call.1} parent=0
    _
  %s13 = ssub.s32 1, %s11
  %s14 = scalar_select 0, %s13, %s11
  $region1: #{tpu_custom_call.1} parent=0
    #allocation2 [shape = 'u8[4608]{0}', space=vmem, size = 0x1400, scoped, tag = 'input window, operand 0, single buffered']
    #allocation3 [shape = 's32[1]{0}', space=sflag, size = 0x4, scoped, tag = 'scoped memory for tpu_custom_call.1']
    #allocation4 [shape = 's32[1]{0}', space=sflag, size = 0x4, scoped, tag = 'scoped memory for tpu_custom_call.1']
    #allocation5 [shape = 'u8[2048]{0}', space=vmem, size = 0x800, scoped, tag = 'input window, operand 6, single buffered']
    #allocation6 [shape = 's32[1]{0}', space=sflag, size = 0x4, scoped, tag = 'scoped memory for tpu_custom_call.1']
    #allocation7 [shape = 'u8[8192]{0}', space=vmem, size = 0x2000, scoped, tag = 'input window, operand 8, single buffered']
    #allocation8 [shape = 'u8[1024]{0}', space=vmem, size = 0x400, scoped, tag = 'output window, operand 0, single buffered']
    %15 = vsyncpa [#allocation3], 0
    %16 = vsyncpa [#allocation6], 0
    %17 = vsyncpa [#allocation4], 0
    // Predicated region
    $region2: #{tpu_custom_call.1} parent=1 // pred_check
      _
    $region3: #{tpu_custom_call.1} parent=1 // pred_check_branch
      %19 = sbr.rel (0) target = $region5
    $region4: #{tpu_custom_call.1} parent=1 // pred_region
      %s21 = ssub.s32 144, 144
      %22 = vsyncadd [#allocation3], %s21
      %s23 = sshll.u32 [#allocation2], 4
      %s24 = int_to_ptr.vmem [resolvable:$true] %s23
      %29 = dma.hbm_to_vmem [thread:$0]  %s0, 144, %s24, [#allocation3], 16, 16, 1
    $region5: #{tpu_custom_call.1} parent=1 // pred_fallthru
      _
    // Predicated region
    $region6: #{tpu_custom_call.1} parent=1 // pred_check
      _
    $region7: #{tpu_custom_call.1} parent=1 // pred_check_branch
      %31 = sbr.rel (0) target = $region9
    $region8: #{tpu_custom_call.1} parent=1 // pred_region
      _
    $region9: #{tpu_custom_call.1} parent=1 // pred_fallthru
      _
    // Predicated region
    $region10: #{tpu_custom_call.1} parent=1 // pred_check
      _
    $region11: #{tpu_custom_call.1} parent=1 // pred_check_branch
      %33 = sbr.rel (0) target = $region13
    $region12: #{tpu_custom_call.1} parent=1 // pred_region
      _
    $region13: #{tpu_custom_call.1} parent=1 // pred_fallthru
      _
    // Predicated region
    $region14: #{tpu_custom_call.1} parent=1 // pred_check
      _
    $region15: #{tpu_custom_call.1} parent=1 // pred_check_branch
      %35 = sbr.rel (0) target = $region17
    $region16: #{tpu_custom_call.1} parent=1 // pred_region
      _
    $region17: #{tpu_custom_call.1} parent=1 // pred_fallthru
      _
    // Predicated region
    $region18: #{tpu_custom_call.1} parent=1 // pred_check
      _
    $region19: #{tpu_custom_call.1} parent=1 // pred_check_branch
      %37 = sbr.rel (0) target = $region21
    $region20: #{tpu_custom_call.1} parent=1 // pred_region
      _
    $region21: #{tpu_custom_call.1} parent=1 // pred_fallthru
      _
    // Predicated region
    $region22: #{tpu_custom_call.1} parent=1 // pred_check
      _
    $region23: #{tpu_custom_call.1} parent=1 // pred_check_branch
      %39 = sbr.rel (0) target = $region25
    $region24: #{tpu_custom_call.1} parent=1 // pred_region
      _
    $region25: #{tpu_custom_call.1} parent=1 // pred_fallthru
      _
    // Predicated region
    $region26: #{tpu_custom_call.1} parent=1 // pred_check
      _
    $region27: #{tpu_custom_call.1} parent=1 // pred_check_branch
      %41 = sbr.rel (0) target = $region29
    $region28: #{tpu_custom_call.1} parent=1 // pred_region
      %s43 = ssub.s32 64, 64
      %44 = vsyncadd [#allocation6], %s43
      %s46 = sshll.u32 [#allocation5], 4
      %s47 = int_to_ptr.vmem [resolvable:$true] %s46
      %49 = dma.hbm_to_vmem [thread:$0]  %s6, 64, %s47, [#allocation6]
    $region29: #{tpu_custom_call.1} parent=1 // pred_fallthru
      _
    // Predicated region
    $region30: #{tpu_custom_call.1} parent=1 // pred_check
      _
    $region31: #{tpu_custom_call.1} parent=1 // pred_check_branch
      %51 = sbr.rel (0) target = $region33
    $region32: #{tpu_custom_call.1} parent=1 // pred_region
      _
    $region33: #{tpu_custom_call.1} parent=1 // pred_fallthru
      _
    // Predicated region
    $region34: #{tpu_custom_call.1} parent=1 // pred_check
      _
    $region35: #{tpu_custom_call.1} parent=1 // pred_check_branch
      %53 = sbr.rel (0) target = $region37
    $region36: #{tpu_custom_call.1} parent=1 // pred_region
      %s55 = ssub.s32 256, 256
      %56 = vsyncadd [#allocation6], %s55
      %s57 = sshll.u32 [#allocation7], 4
      %s58 = int_to_ptr.vmem [resolvable:$true] %s57
      %63 = dma.hbm_to_vmem [thread:$0]  %s8, 256, %s58, [#allocation6], 64, 64, 4
    $region37: #{tpu_custom_call.1} parent=1 // pred_fallthru
      _
    // Predicated region
    $region38: #{tpu_custom_call.1} parent=1 // pred_check
      _
    $region39: #{tpu_custom_call.1} parent=1 // pred_check_branch
      %65 = sbr.rel (0) target = $region41
    $region40: #{tpu_custom_call.1} parent=1 // pred_region
      _
    $region41: #{tpu_custom_call.1} parent=1 // pred_fallthru
      _
    // Predicated region
    $region42: #{tpu_custom_call.1} parent=1 // pred_check
      _
    $region43: #{tpu_custom_call.1} parent=1 // pred_check_branch
      %67 = sbr.rel (0) target = $region45
    $region44: #{tpu_custom_call.1} parent=1 // pred_region
      %68 = dma.done [#allocation3], 144
    $region45: #{tpu_custom_call.1} parent=1 // pred_fallthru
      _
    // Predicated region
    $region46: #{tpu_custom_call.1} parent=1 // pred_check
      _
    $region47: #{tpu_custom_call.1} parent=1 // pred_check_branch
      %70 = sbr.rel (0) target = $region49
    $region48: #{tpu_custom_call.1} parent=1 // pred_region
      %71 = dma.done [#allocation6], 64
    $region49: #{tpu_custom_call.1} parent=1 // pred_fallthru
      _
    // Predicated region
    $region50: #{tpu_custom_call.1} parent=1 // pred_check
      _
    $region51: #{tpu_custom_call.1} parent=1 // pred_check_branch
      %73 = sbr.rel (0) target = $region53
    $region52: #{tpu_custom_call.1} parent=1 // pred_region
      %74 = dma.done [#allocation6], 256
    $region53: #{tpu_custom_call.1} parent=1 // pred_fallthru
      _
    %v76 = vld [vmem:[#allocation2] sm:$0x1]
    %v77 = vld [vmem:[#allocation2 + $0x1] sm:$0x1]
    %v78 = vld [vmem:[#allocation2 + $0x2] sm:$0x1]
    %v79 = vld [vmem:[#allocation2 + $0x3] sm:$0x1]
    %v80 = vld [vmem:[#allocation2 + $0x4] sm:$0x1]
    %v81 = vld [vmem:[#allocation2 + $0x5] sm:$0x1]
    %v82 = vld [vmem:[#allocation2 + $0x6] sm:$0x1]
    %v83 = vld [vmem:[#allocation2 + $0x7] sm:$0x1]
    %v84 = vld [vmem:[#allocation2 + $0x8] sm:$0x1]
    %v85 = vld [vmem:[%s2] sm:$0xf]
    %v86 = vld [vmem:[%s2 + $0x4] sm:$0xf]
    %v87 = vld [vmem:[%s2 + $0x8] sm:$0xf]
    %v88 = vld [vmem:[%s2 + $0xc] sm:$0xf]
    %v89 = vld [vmem:[%s2 + $0x10] sm:$0xf]
    %v90 = vld [vmem:[%s2 + $0x14] sm:$0xf]
    %v91 = vld [vmem:[%s1] sm:$0x3]
    %v92 = vld [vmem:[%s1 + $0x2] sm:$0x3]
    %v93 = vld [vmem:[%s1 + $0x4] sm:$0x3]
    %v94 = vld [vmem:[%s1 + $0x6] sm:$0x3]
    %v95 = vld [vmem:[%s1 + $0x8] sm:$0x3]
    %v96 = vld [vmem:[%s1 + $0xa] sm:$0x3]
    %v97 = vld [vmem:[%s1 + $0xc] sm:$0x3]
    %v98 = vld [vmem:[%s1 + $0xe] sm:$0x3]
    %v99 = vld [vmem:[%s1 + $0x10] sm:$0x3]
    %v109 = vcombine.low %v76, %v77
    %v110 = vcombine.low %v78, %v79
    %v111 = vcombine.low %v80, %v81
    %v112 = vcombine.low %v82, %v83
    %v114 = vunpack.c.l.s4 1966171168
    %v115 = vunpack.c.0.s8 %v114
    %v116 = vlaneseq
    %v117 = vshrl.u32 %v116, 7
    %v118 = vsub.s32 %v115, %v117
    %v119 = vrot.slane %v109, %v118
    %v121 = vunpack.c.l.s4 1966171168
    %v122 = vunpack.c.0.s8 %v121
    %v123 = vlaneseq
    %v124 = vshrl.u32 %v123, 7
    %v125 = vsub.s32 %v122, %v124
    %v126 = vrot.slane %v110, %v125
    %v128 = vunpack.c.l.s4 1966171168
    %v129 = vunpack.c.0.s8 %v128
    %v130 = vlaneseq
    %v131 = vshrl.u32 %v130, 7
    %v132 = vsub.s32 %v129, %v131
    %v133 = vrot.slane %v111, %v132
    %v135 = vunpack.c.l.s4 1966171168
    %v136 = vunpack.c.0.s8 %v135
    %v137 = vlaneseq
    %v138 = vshrl.u32 %v137, 7
    %v139 = vsub.s32 %v136, %v138
    %v140 = vrot.slane %v112, %v139
    %v141 = vcombine.low %v119, %v126
    %v142 = vcombine.low %v133, %v140
    %v144 = vunpack.c.l.s4 1966171168
    %v145 = vunpack.c.0.s8 %v144
    %v146 = vlaneseq
    %v147 = vshrl.u32 %v146, 7
    %v148 = vsub.s32 %v145, %v147
    %v149 = vrot.slane %v141, %v148
    %v151 = vunpack.c.l.s4 1966171168
    %v152 = vunpack.c.0.s8 %v151
    %v153 = vlaneseq
    %v154 = vshrl.u32 %v153, 7
    %v155 = vsub.s32 %v152, %v154
    %v156 = vrot.slane %v142, %v155
    %v157 = vcombine.low %v149, %v156
    %v159 = vunpack.c.l.s4 1966171168
    %v160 = vunpack.c.0.s8 %v159
    %v161 = vlaneseq
    %v162 = vshrl.u32 %v161, 7
    %v163 = vsub.s32 %v160, %v162
    %v164 = vrot.slane %v84, %v163
    %v166 = vunpack.c.l.s4 1966171168
    %v167 = vunpack.c.0.s8 %v166
    %v168 = vlaneseq
    %v169 = vshrl.u32 %v168, 7
    %v170 = vsub.s32 %v167, %v169
    %v171 = vrot.slane %v164, %v170
    %v178 = vunpack.c.l.b16 %v85
    %v179 = vunpack.c.l.b16 %v86
    %v180 = vunpack.c.l.b16 %v87
    %v181 = vunpack.c.l.b16 %v88
    %v182 = vunpack.c.l.b16 %v89
    %v183 = vunpack.c.l.b16 %v90
    %v184 = vpack.c.b16 %v179, %v178
    %v185 = vpack.c.b16 %v181, %v180
    %v186 = vpack.c.b16 %v183, %v182
    %v199 = vcombine.low %v91, %v92
    %v200 = vcombine.low %v93, %v94
    %v202 = vunpack.c.l.s4 1983009808
    %v203 = vunpack.c.0.s8 %v202
    %v204 = vlaneseq
    %v205 = vshrl.u32 %v204, 7
    %v206 = vsub.s32 %v203, %v205
    %v207 = vrot.slane %v199, %v206
    %v209 = vunpack.c.l.s4 1983009808
    %v210 = vunpack.c.0.s8 %v209
    %v211 = vlaneseq
    %v212 = vshrl.u32 %v211, 7
    %v213 = vsub.s32 %v210, %v212
    %v214 = vrot.slane %v200, %v213
    %v215 = vcombine.low %v207, %v214
    %v216 = vcombine.low %v95, %v96
    %v217 = vcombine.low %v97, %v98
    %v219 = vunpack.c.l.s4 1983009808
    %v220 = vunpack.c.0.s8 %v219
    %v221 = vlaneseq
    %v222 = vshrl.u32 %v221, 7
    %v223 = vsub.s32 %v220, %v222
    %v224 = vrot.slane %v216, %v223
    %v226 = vunpack.c.l.s4 1983009808
    %v227 = vunpack.c.0.s8 %v226
    %v228 = vlaneseq
    %v229 = vshrl.u32 %v228, 7
    %v230 = vsub.s32 %v227, %v229
    %v231 = vrot.slane %v217, %v230
    %v232 = vcombine.low %v224, %v231
    %v234 = vunpack.c.l.s4 1983009808
    %v235 = vunpack.c.0.s8 %v234
    %v236 = vlaneseq
    %v237 = vshrl.u32 %v236, 7
    %v238 = vsub.s32 %v235, %v237
    %v239 = vrot.slane %v99, %v238
    %vm243 = vcmask 392192
    %v245 = vsel %vm243, %v157, 0
    %v248 = vsel %vm243, %v171, 0
    %250 = vmatprep.subr.bf16.mxu0 0
    %251 = vmatpush1.bf16.msra.mxu0 0
    %252 = vmatprep.subr.bf16.mxu0 0
    %253 = vmatpush1.bf16.msra.mxu0 0
    %254 = vmatprep.subr.bf16.mxu0 0
    %255 = vmatpush1.bf16.msra.mxu0 0
    %256 = vmatprep.subr.bf16.mxu0 0
    %257 = vmatpush1.bf16.msra.mxu0 0
    %258 = vmatprep.subr.bf16.mxu0 0
    %259 = vmatpush1.bf16.msra.mxu0 0
    %260 = vmatprep.subr.bf16.mxu0 0
    %261 = vmatpush1.bf16.msra.mxu0 %v186
    %262 = vmatprep.subr.bf16.mxu0 0
    %263 = vmatpush1.bf16.msra.mxu0 %v185
    %264 = vmatprep.subr.bf16.mxu0 0
    %265 = vmatpush1.bf16.msra.mxu0 %v184
    %266 = vmatprep.subr.bf16.mxu0 0
    %267 = vmatpush2.bf16.msra.mxu0 0
    %268 = vmatprep.subr.bf16.mxu0 0
    %269 = vmatpush2.bf16.msra.mxu0 0
    %270 = vmatprep.subr.bf16.mxu0 0
    %271 = vmatpush2.bf16.msra.mxu0 0
    %272 = vmatprep.subr.bf16.mxu0 0
    %273 = vmatpush2.bf16.msra.mxu0 0
    %274 = vmatprep.subr.bf16.mxu0 0
    %275 = vmatpush2.bf16.msra.mxu0 0
    %276 = vmatprep.subr.bf16.mxu0 0
    %277 = vmatpush2.bf16.msra.mxu0 0
    %278 = vmatprep.subr.bf16.mxu0 0
    %279 = vmatpush2.bf16.msra.mxu0 0
    %280 = vmatprep.subr.bf16.mxu0 0
    %281 = vmatpush2.bf16.msra.mxu0 0
    %282 = vmatprep.mubr.bf16.mxu0 0
    %283 = vmatmul.mubr.bf16.gmra.mxu0 %v245
    %v284 = vpop.f32.mrf.mxu0
    %v285 = vadd.f32 %v215, %v284
    %v286 = vpop.f32.mrf.mxu0
    %v287 = vpop.f32.mrf.mxu0
    %v288 = vadd.f32 %v232, %v287
    %v289 = vpop.f32.mrf.mxu0
    %290 = vmatprep.mubr.bf16.mxu0 0
    %291 = vmatmul.mubr.bf16.gmra.mxu0 %v248
    %v292 = vpop.f32.mrf.mxu0
    %v293 = vadd.f32 %v239, %v292
    %v294 = vpop.f32.mrf.mxu0
    %v295 = vpop.f32.mrf.mxu0
    %v296 = vpop.f32.mrf.mxu0
    %297 = vdwg.mxu0
    %v301 = vcombine.high %v285, %v285
    %v303 = vunpack.c.l.s4 1983009808
    %v304 = vunpack.c.0.s8 %v303
    %v305 = vlaneseq
    %v306 = vshrl.u32 %v305, 7
    %v307 = vsub.s32 %v304, %v306
    %v308 = vrot.slane %v285, %v307
    %v310 = vunpack.c.l.s4 1983009808
    %v311 = vunpack.c.0.s8 %v310
    %v312 = vlaneseq
    %v313 = vshrl.u32 %v312, 7
    %v314 = vsub.s32 %v311, %v313
    %v315 = vrot.slane %v301, %v314
    %v316 = vcombine.high %v308, %v308
    %v317 = vcombine.high %v315, %v315
    %v318 = vcombine.high %v288, %v288
    %v320 = vunpack.c.l.s4 1983009808
    %v321 = vunpack.c.0.s8 %v320
    %v322 = vlaneseq
    %v323 = vshrl.u32 %v322, 7
    %v324 = vsub.s32 %v321, %v323
    %v325 = vrot.slane %v288, %v324
    %v327 = vunpack.c.l.s4 1983009808
    %v328 = vunpack.c.0.s8 %v327
    %v329 = vlaneseq
    %v330 = vshrl.u32 %v329, 7
    %v331 = vsub.s32 %v328, %v330
    %v332 = vrot.slane %v318, %v331
    %v333 = vcombine.high %v325, %v325
    %v334 = vcombine.high %v332, %v332
    %v336 = vunpack.c.l.s4 1983009808
    %v337 = vunpack.c.0.s8 %v336
    %v338 = vlaneseq
    %v339 = vshrl.u32 %v338, 7
    %v340 = vsub.s32 %v337, %v339
    %v341 = vrot.slane %v293, %v340
    %v351 = vmax.f32 %v308, 0.0
    %v352 = vmax.f32 %v316, 0.0
    %v353 = vmax.f32 %v315, 0.0
    %v354 = vmax.f32 %v317, 0.0
    %v355 = vmax.f32 %v325, 0.0
    %v356 = vmax.f32 %v333, 0.0
    %v357 = vmax.f32 %v332, 0.0
    %v358 = vmax.f32 %v334, 0.0
    %v359 = vmax.f32 %v341, 0.0
    %v360 = vld [vmem:[%s3] sm:$0x3]
    %v361 = vld [vmem:[%s3 + $0x2] sm:$0x3]
    %v362 = vld [vmem:[%s3 + $0x4] sm:$0x3]
    %v363 = vld [vmem:[%s3 + $0x6] sm:$0x3]
    %v364 = vld [vmem:[%s3 + $0x8] sm:$0x3]
    %v365 = vld [vmem:[%s3 + $0xa] sm:$0x3]
    %v366 = vld [vmem:[%s3 + $0xc] sm:$0x3]
    %v367 = vld [vmem:[%s3 + $0xe] sm:$0x3]
    %v368 = vlaneseq
    %v369 = vand.u32 %v368, 127
    %v370 = vadd.s32 %v369, 128
    %vm371 = vcmp.lt.s32.totalorder %v369, 0
    %v372 = vsub.s32 0, %v369
    %v373 = vsel %vm371, %v372, %v369
    %v374 = vshrl.u32 %v373, 6
    %v375 = vand.u32 %v373, 63
    %v376 = vsub.s32 0, %v375
    %v377 = vsel %vm371, %v376, %v375
    %vm378 = vcmp.lt.s32.totalorder %v370, 0
    %v379 = vsub.s32 0, %v370
    %v380 = vsel %vm378, %v379, %v370
    %v381 = vshrl.u32 %v380, 6
    %v382 = vand.u32 %v380, 63
    %v383 = vsub.s32 0, %v382
    %v384 = vsel %vm378, %v383, %v382
    %vm385 = vcmp.ne.s32.totalorder %v377, 0
    %vm386 = vcmp.ne.s32.totalorder %v384, 0
    %vm387 = vcmp.lt.s32.totalorder %v377, 0
    %vm388 = vcmp.lt.s32.totalorder %v384, 0
    %vm389 = vmand %vm387, %vm385
    %vm390 = vmand %vm388, %vm386
    %v391 = vadd.s32 %v377, 64
    %v392 = vadd.s32 %v384, 64
    %v393 = vsel %vm389, %v391, %v377
    %v394 = vsel %vm390, %v392, %v384
    %vm395 = vcmp.lt.s32.totalorder %v393, 32
    %vm396 = vcmp.lt.s32.totalorder %v394, 32
    %vm397 = vcmp.lt.s32.totalorder %v369, 32
    %399 = vset.pattern.permute.xlu0 0
    %400 = vperm.xlu0 %399, %v360
    %v401 = vpop.permute.xlu0 %400
    %404 = vset.pattern.permute.xlu0 0
    %405 = vperm.xlu0 %404, %v367
    %v406 = vpop.permute.xlu0 %405
    %v408 = vsel %vm397, 1, 0
    %vm409 = vcmp.eq.s32.totalorder %v408, 1
    %v410 = vsel %vm409, %v401, %v406
    %412 = vset.pattern.permute.xlu0 0
    %413 = vperm.xlu0 %412, %v361
    %v414 = vpop.permute.xlu0 %413
    %417 = vset.pattern.permute.xlu0 0
    %418 = vperm.xlu0 %417, %v366
    %v419 = vpop.permute.xlu0 %418
    %v421 = vsel %vm409, %v414, %v419
    %423 = vset.pattern.permute.xlu0 0
    %424 = vperm.xlu0 %423, %v362
    %v425 = vpop.permute.xlu0 %424
    %428 = vset.pattern.permute.xlu0 0
    %429 = vperm.xlu0 %428, %v365
    %v430 = vpop.permute.xlu0 %429
    %v432 = vsel %vm409, %v425, %v430
    %434 = vset.pattern.permute.xlu0 0
    %435 = vperm.xlu0 %434, %v363
    %v436 = vpop.permute.xlu0 %435
    %439 = vset.pattern.permute.xlu0 0
    %440 = vperm.xlu0 %439, %v364
    %v441 = vpop.permute.xlu0 %440
    %v443 = vsel %vm409, %v436, %v441
    %v444 = vsel %vm409, %v441, %v436
    %v445 = vsel %vm409, %v430, %v425
    %v446 = vsel %vm409, %v419, %v414
    %v447 = vsel %vm409, %v406, %v401
    %v448 = vld [vmem:[%s5] sm:$0xff]
    %v449 = vld [vmem:[%s5 + $0x8] sm:$0xff]
    %v450 = vld [vmem:[%s5 + $0x10] sm:$0xff]
    %v451 = vld [vmem:[%s5 + $0x18] sm:$0xff]
    %v452 = vld [vmem:[%s5 + $0x20] sm:$0xff]
    %v453 = vld [vmem:[%s5 + $0x28] sm:$0xff]
    %v454 = vld [vmem:[%s5 + $0x30] sm:$0xff]
    %v455 = vld [vmem:[%s5 + $0x38] sm:$0xff]
    %v456 = vld [vmem:[#allocation5] ss:$2 sm:$0x3]
    %s457 = scalar_lea.vmem [#allocation5], 1
    %v458 = vld [vmem:[%s457] ss:$2 sm:$0x3]
    %v459 = vpack.c.bf16 %v351, %v351
    %v460 = vpack.c.bf16 %v352, %v352
    %v461 = vpack.c.bf16 %v353, %v353
    %v462 = vpack.c.bf16 %v354, %v354
    %v463 = vpack.c.bf16 %v355, %v355
    %v464 = vpack.c.bf16 %v356, %v356
    %v465 = vpack.c.bf16 %v357, %v357
    %v466 = vpack.c.bf16 %v358, %v358
    %v467 = vld [vmem:[%s4] sm:$0xff]
    %v468 = vld [vmem:[%s4 + $0x8] sm:$0xff]
    %v469 = vld [vmem:[%s4 + $0x10] sm:$0xff]
    %v470 = vld [vmem:[%s4 + $0x18] sm:$0xff]
    %v472 = vlaneseq
    %v473 = vshrl.u32 %v472, 7
    %v474 = vsub.s32 0, %v473
    %v475 = vrot.slane %v456, %v474
    %v476 = vlaneseq
    %v477 = vshrl.u32 %v476, 7
    %v478 = vsub.s32 1, %v477
    %v479 = vrot.slane %v456, %v478
    %v480 = vcombine.low %v475, %v479
    %v482 = vunpack.c.l.s4 1983009808
    %v483 = vunpack.c.0.s8 %v482
    %v484 = vlaneseq
    %v485 = vshrl.u32 %v484, 7
    %v486 = vsub.s32 %v483, %v485
    %v487 = vrot.slane %v480, %v486
    %v496 = vcombine.low %v459, %v460
    %v497 = vcombine.low %v461, %v462
    %v498 = vcombine.low %v463, %v464
    %v499 = vcombine.low %v465, %v466
    %v501 = vunpack.c.l.s4 1966171168
    %v502 = vunpack.c.0.s8 %v501
    %v503 = vlaneseq
    %v504 = vshrl.u32 %v503, 7
    %v505 = vsub.s32 %v502, %v504
    %v506 = vrot.slane %v496, %v505
    %v508 = vunpack.c.l.s4 1966171168
    %v509 = vunpack.c.0.s8 %v508
    %v510 = vlaneseq
    %v511 = vshrl.u32 %v510, 7
    %v512 = vsub.s32 %v509, %v511
    %v513 = vrot.slane %v497, %v512
    %v515 = vunpack.c.l.s4 1966171168
    %v516 = vunpack.c.0.s8 %v515
    %v517 = vlaneseq
    %v518 = vshrl.u32 %v517, 7
    %v519 = vsub.s32 %v516, %v518
    %v520 = vrot.slane %v498, %v519
    %v522 = vunpack.c.l.s4 1966171168
    %v523 = vunpack.c.0.s8 %v522
    %v524 = vlaneseq
    %v525 = vshrl.u32 %v524, 7
    %v526 = vsub.s32 %v523, %v525
    %v527 = vrot.slane %v499, %v526
    %v528 = vcombine.low %v506, %v513
    %v529 = vcombine.low %v520, %v527
    %v531 = vunpack.c.l.s4 1966171168
    %v532 = vunpack.c.0.s8 %v531
    %v533 = vlaneseq
    %v534 = vshrl.u32 %v533, 7
    %v535 = vsub.s32 %v532, %v534
    %v536 = vrot.slane %v528, %v535
    %v538 = vunpack.c.l.s4 1966171168
    %v539 = vunpack.c.0.s8 %v538
    %v540 = vlaneseq
    %v541 = vshrl.u32 %v540, 7
    %v542 = vsub.s32 %v539, %v541
    %v543 = vrot.slane %v529, %v542
    %v544 = vcombine.low %v536, %v543
    %v549 = vunpack.c.l.b16 %v467
    %v550 = vunpack.c.h.b16 %v467
    %v551 = vunpack.c.l.b16 %v468
    %v552 = vunpack.c.h.b16 %v468
    %v553 = vunpack.c.l.b16 %v469
    %v554 = vunpack.c.h.b16 %v469
    %v555 = vunpack.c.l.b16 %v470
    %v556 = vunpack.c.h.b16 %v470
    %v557 = vpack.c.b16 %v551, %v549
    %v558 = vpack.c.b16 %v552, %v550
    %v559 = vpack.c.b16 %v555, %v553
    %v560 = vpack.c.b16 %v556, %v554
    %v565 = vcombine.low %v487, %v487
    %v567 = vunpack.c.l.s4 1983009808
    %v568 = vunpack.c.0.s8 %v567
    %v569 = vlaneseq
    %v570 = vshrl.u32 %v569, 7
    %v571 = vsub.s32 %v568, %v570
    %v572 = vrot.slane %v565, %v571
    %v573 = vcombine.low %v572, %v572
    %v574 = vcombine.high %v572, %v572
    %vm577 = vcmask 261120
    %v579 = vsel %vm577, %v544, 0
    %581 = vmatprep.subr.bf16.mxu0 0
    %582 = vmatpush1.bf16.msra.mxu0 0
    %583 = vmatprep.subr.bf16.mxu0 0
    %584 = vmatpush1.bf16.msra.mxu0 0
    %585 = vmatprep.subr.bf16.mxu0 0
    %586 = vmatpush1.bf16.msra.mxu0 0
    %587 = vmatprep.subr.bf16.mxu0 0
    %588 = vmatpush1.bf16.msra.mxu0 0
    %589 = vmatprep.subr.bf16.mxu0 0
    %590 = vmatpush1.bf16.msra.mxu0 0
    %591 = vmatprep.subr.bf16.mxu0 0
    %592 = vmatpush1.bf16.msra.mxu0 0
    %593 = vmatprep.subr.bf16.mxu0 %v560
    %594 = vmatpush1.bf16.msra.mxu0 %v559
    %595 = vmatprep.subr.bf16.mxu0 %v558
    %596 = vmatpush1.bf16.msra.mxu0 %v557
    %597 = vmatprep.subr.bf16.mxu0 0
    %598 = vmatpush2.bf16.msra.mxu0 0
    %599 = vmatprep.subr.bf16.mxu0 0
    %600 = vmatpush2.bf16.msra.mxu0 0
    %601 = vmatprep.subr.bf16.mxu0 0
    %602 = vmatpush2.bf16.msra.mxu0 0
    %603 = vmatprep.subr.bf16.mxu0 0
    %604 = vmatpush2.bf16.msra.mxu0 0
    %605 = vmatprep.subr.bf16.mxu0 0
    %606 = vmatpush2.bf16.msra.mxu0 0
    %607 = vmatprep.subr.bf16.mxu0 0
    %608 = vmatpush2.bf16.msra.mxu0 0
    %609 = vmatprep.subr.bf16.mxu0 0
    %610 = vmatpush2.bf16.msra.mxu0 0
    %611 = vmatprep.subr.bf16.mxu0 0
    %612 = vmatpush2.bf16.msra.mxu0 0
    %613 = vmatprep.mubr.bf16.mxu0 0
    %614 = vmatmul.mubr.bf16.gmra.mxu0 %v579
    %v615 = vpop.f32.mrf.mxu0
    %v616 = vadd.f32 %v573, %v615
    %v617 = vpop.f32.mrf.mxu0
    %v618 = vadd.f32 %v574, %v617
    %v619 = vpop.f32.mrf.mxu0
    %v620 = vadd.f32 %v573, %v619
    %v621 = vpop.f32.mrf.mxu0
    %v622 = vadd.f32 %v574, %v621
    %623 = vdwg.mxu0
    %v628 = vcombine.low %v616, %v618
    %v629 = vcombine.high %v616, %v618
    %v631 = vunpack.c.l.s4 1983009808
    %v632 = vunpack.c.0.s8 %v631
    %v633 = vlaneseq
    %v634 = vshrl.u32 %v633, 7
    %v635 = vsub.s32 %v632, %v634
    %v636 = vrot.slane %v628, %v635
    %v638 = vunpack.c.l.s4 1983009808
    %v639 = vunpack.c.0.s8 %v638
    %v640 = vlaneseq
    %v641 = vshrl.u32 %v640, 7
    %v642 = vsub.s32 %v639, %v641
    %v643 = vrot.slane %v629, %v642
    %v644 = vcombine.high %v636, %v636
    %v645 = vcombine.high %v643, %v643
    %v646 = vcombine.low %v620, %v622
    %v647 = vcombine.high %v620, %v622
    %v649 = vunpack.c.l.s4 1983009808
    %v650 = vunpack.c.0.s8 %v649
    %v651 = vlaneseq
    %v652 = vshrl.u32 %v651, 7
    %v653 = vsub.s32 %v650, %v652
    %v654 = vrot.slane %v646, %v653
    %v656 = vunpack.c.l.s4 1983009808
    %v657 = vunpack.c.0.s8 %v656
    %v658 = vlaneseq
    %v659 = vshrl.u32 %v658, 7
    %v660 = vsub.s32 %v657, %v659
    %v661 = vrot.slane %v647, %v660
    %v662 = vcombine.high %v654, %v654
    %v663 = vcombine.high %v661, %v661
    %v664 = vsel %vm395, 1, 0
    %v665 = vsel %vm396, 1, 0
    %vm666 = vcmp.eq.s32.totalorder %v664, 1
    %vm667 = vcmp.eq.s32.totalorder %v665, 1
    %v669 = vunpack.c.l.s4 1983009808
    %v670 = vunpack.c.0.s8 %v669
    %v671 = vlaneseq
    %v672 = vshrl.u32 %v671, 7
    %v673 = vsub.s32 %v670, %v672
    %v674 = vrot.slane %v636, %v673
    %v675 = vcombine.high %v674, %v674
    %v679 = vunpack.c.l.s4 1983009808
    %v680 = vunpack.c.0.s8 %v679
    %v681 = vlaneseq
    %v682 = vshrl.u32 %v681, 7
    %v683 = vsub.s32 %v680, %v682
    %v684 = vrot.slane %v663, %v683
    %v685 = vcombine.high %v684, %v684
    %v688 = vsel %vm666, %v674, %v684
    %v689 = vsel %vm667, %v675, %v685
    %v691 = vlaneseq
    %v692 = vshrl.u32 %v691, 7
    %v693 = vsub.s32 0, %v692
    %v694 = vrot.slane %v458, %v693
    %v695 = vlaneseq
    %v696 = vshrl.u32 %v695, 7
    %v697 = vsub.s32 1, %v696
    %v698 = vrot.slane %v458, %v697
    %v709 = vunpack.c.l.b16 %v448
    %v710 = vunpack.c.h.b16 %v448
    %v711 = vunpack.c.l.b16 %v449
    %v712 = vunpack.c.h.b16 %v449
    %v713 = vunpack.c.l.b16 %v450
    %v714 = vunpack.c.h.b16 %v450
    %v715 = vunpack.c.l.b16 %v451
    %v716 = vunpack.c.h.b16 %v451
    %v717 = vunpack.c.l.b16 %v452
    %v718 = vunpack.c.h.b16 %v452
    %v719 = vunpack.c.l.b16 %v453
    %v720 = vunpack.c.h.b16 %v453
    %v721 = vunpack.c.l.b16 %v454
    %v722 = vunpack.c.h.b16 %v454
    %v723 = vunpack.c.l.b16 %v455
    %v724 = vunpack.c.h.b16 %v455
    %v725 = vpack.c.b16 %v711, %v709
    %v726 = vpack.c.b16 %v712, %v710
    %v727 = vpack.c.b16 %v715, %v713
    %v728 = vpack.c.b16 %v716, %v714
    %v729 = vpack.c.b16 %v719, %v717
    %v730 = vpack.c.b16 %v720, %v718
    %v731 = vpack.c.b16 %v723, %v721
    %v732 = vpack.c.b16 %v724, %v722
    %vm741 = vcmask 523264
    %v743 = vsel %vm741, 0, 0
    %745 = vmatprep.subr.bf16.mxu0 0
    %746 = vmatpush1.bf16.msra.mxu0 0
    %747 = vmatprep.subr.bf16.mxu0 0
    %748 = vmatpush1.bf16.msra.mxu0 0
    %749 = vmatprep.subr.bf16.mxu0 0
    %750 = vmatpush1.bf16.msra.mxu0 0
    %751 = vmatprep.subr.bf16.mxu0 0
    %752 = vmatpush1.bf16.msra.mxu0 0
    %753 = vmatprep.subr.bf16.mxu0 %v732
    %754 = vmatpush1.bf16.msra.mxu0 %v731
    %755 = vmatprep.subr.bf16.mxu0 %v730
    %756 = vmatpush1.bf16.msra.mxu0 %v729
    %757 = vmatprep.subr.bf16.mxu0 %v728
    %758 = vmatpush1.bf16.msra.mxu0 %v727
    %759 = vmatprep.subr.bf16.mxu0 %v726
    %760 = vmatpush1.bf16.msra.mxu0 %v725
    %761 = vmatprep.subr.bf16.mxu0 0
    %762 = vmatpush2.bf16.msra.mxu0 0
    %763 = vmatprep.subr.bf16.mxu0 0
    %764 = vmatpush2.bf16.msra.mxu0 0
    %765 = vmatprep.subr.bf16.mxu0 0
    %766 = vmatpush2.bf16.msra.mxu0 0
    %767 = vmatprep.subr.bf16.mxu0 0
    %768 = vmatpush2.bf16.msra.mxu0 0
    %769 = vmatprep.subr.bf16.mxu0 0
    %770 = vmatpush2.bf16.msra.mxu0 0
    %771 = vmatprep.subr.bf16.mxu0 0
    %772 = vmatpush2.bf16.msra.mxu0 0
    %773 = vmatprep.subr.bf16.mxu0 0
    %774 = vmatpush2.bf16.msra.mxu0 0
    %775 = vmatprep.subr.bf16.mxu0 0
    %776 = vmatpush2.bf16.msra.mxu0 0
    %777 = vmatprep.mubr.bf16.mxu0 0
    %778 = vmatmul.mubr.bf16.gmra.mxu0 %v743
    %v779 = vpop.f32.mrf.mxu0
    %v780 = vadd.f32 %v694, %v779
    %v781 = vpop.f32.mrf.mxu0
    %v782 = vadd.f32 %v698, %v781
    %v783 = vpop.f32.mrf.mxu0
    %v784 = vpop.f32.mrf.mxu0
    %785 = vdwg.mxu0
    %v786 = vadd.f32 %v688, %v780
    %v787 = vxor.u32 %v786, 2147483648
    %v788 = vmul.f32 %v787, 1.442695
    %v789 = vpow.pop %v788
    %v790 = vadd.f32 %v789, 1.0
    %v791 = vrcp.pop %v790
    %v792 = vmul.f32 1.0, %v791
    %v793 = vmul.f32 %v792, %v782
    %v794 = vadd.f32 %v689, %v793
    %v795 = vtanh.pop %v794
    %v796 = vsub.f32 1.0, %v792
    %798 = vrot.lane.b32.xlu0 %v795, 64
    %v799 = vpop.permute.xlu0 %798
    %v801 = vmul.f32 %v796, %v799
    %v802 = vmul.f32 %v792, 0.0
    %v803 = vadd.f32 %v801, %v802
    %805 = vrot.lane.b32.xlu0 %v803, 64
    %v806 = vpop.permute.xlu0 %805
    %v808 = vmul.f32 %v410, %v806
    %v809 = vmul.f32 %v410, 0.0
    %v810 = vsub.f32 0.0, %v809
    %v811 = vadd.f32 %v808, %v810
    %v813 = vunpack.c.l.s4 1983009808
    %v814 = vunpack.c.0.s8 %v813
    %v815 = vlaneseq
    %v816 = vshrl.u32 %v815, 7
    %v817 = vsub.s32 %v814, %v816
    %v818 = vrot.slane %v644, %v817
    %v819 = vcombine.high %v818, %v818
    %v823 = vunpack.c.l.s4 1983009808
    %v824 = vunpack.c.0.s8 %v823
    %v825 = vlaneseq
    %v826 = vshrl.u32 %v825, 7
    %v827 = vsub.s32 %v824, %v826
    %v828 = vrot.slane %v661, %v827
    %v829 = vcombine.high %v828, %v828
    %v832 = vsel %vm666, %v818, %v828
    %v833 = vsel %vm667, %v819, %v829
    %v834 = vpack.c.bf16 %v811, %v811
    %v836 = vsel %vm741, %v834, 0
    %838 = vmatprep.subr.bf16.mxu0 0
    %839 = vmatpush1.bf16.msra.mxu0 0
    %840 = vmatprep.subr.bf16.mxu0 0
    %841 = vmatpush1.bf16.msra.mxu0 0
    %842 = vmatprep.subr.bf16.mxu0 0
    %843 = vmatpush1.bf16.msra.mxu0 0
    %844 = vmatprep.subr.bf16.mxu0 0
    %845 = vmatpush1.bf16.msra.mxu0 0
    %846 = vmatprep.subr.bf16.mxu0 %v732
    %847 = vmatpush1.bf16.msra.mxu0 %v731
    %848 = vmatprep.subr.bf16.mxu0 %v730
    %849 = vmatpush1.bf16.msra.mxu0 %v729
    %850 = vmatprep.subr.bf16.mxu0 %v728
    %851 = vmatpush1.bf16.msra.mxu0 %v727
    %852 = vmatprep.subr.bf16.mxu0 %v726
    %853 = vmatpush1.bf16.msra.mxu0 %v725
    %854 = vmatprep.subr.bf16.mxu0 0
    %855 = vmatpush2.bf16.msra.mxu0 0
    %856 = vmatprep.subr.bf16.mxu0 0
    %857 = vmatpush2.bf16.msra.mxu0 0
    %858 = vmatprep.subr.bf16.mxu0 0
    %859 = vmatpush2.bf16.msra.mxu0 0
    %860 = vmatprep.subr.bf16.mxu0 0
    %861 = vmatpush2.bf16.msra.mxu0 0
    %862 = vmatprep.subr.bf16.mxu0 0
    %863 = vmatpush2.bf16.msra.mxu0 0
    %864 = vmatprep.subr.bf16.mxu0 0
    %865 = vmatpush2.bf16.msra.mxu0 0
    %866 = vmatprep.subr.bf16.mxu0 0
    %867 = vmatpush2.bf16.msra.mxu0 0
    %868 = vmatprep.subr.bf16.mxu0 0
    %869 = vmatpush2.bf16.msra.mxu0 0
    %870 = vmatprep.mubr.bf16.mxu0 0
    %871 = vmatmul.mubr.bf16.gmra.mxu0 %v836
    %v872 = vpop.f32.mrf.mxu0
    %v873 = vadd.f32 %v694, %v872
    %v874 = vpop.f32.mrf.mxu0
    %v875 = vadd.f32 %v698, %v874
    %v876 = vpop.f32.mrf.mxu0
    %v877 = vpop.f32.mrf.mxu0
    %878 = vdwg.mxu0
    %v879 = vadd.f32 %v832, %v873
    %v880 = vxor.u32 %v879, 2147483648
    %v881 = vmul.f32 %v880, 1.442695
    %v882 = vpow.pop %v881
    %v883 = vadd.f32 %v882, 1.0
    %v884 = vrcp.pop %v883
    %v885 = vmul.f32 1.0, %v884
    %v886 = vmul.f32 %v885, %v875
    %v887 = vadd.f32 %v833, %v886
    %v888 = vtanh.pop %v887
    %v889 = vsub.f32 1.0, %v885
    %891 = vrot.lane.b32.xlu0 %v888, 64
    %v892 = vpop.permute.xlu0 %891
    %v894 = vmul.f32 %v889, %v892
    %896 = vrot.lane.b32.xlu0 %v811, 64
    %v897 = vpop.permute.xlu0 %896
    %v899 = vmul.f32 %v885, %v897
    %v900 = vadd.f32 %v894, %v899
    %902 = vrot.lane.b32.xlu0 %v900, 64
    %v903 = vpop.permute.xlu0 %902
    %v905 = vmul.f32 %v421, %v903
    %v906 = vmul.f32 %v421, %v811
    %v907 = vsub.f32 %v811, %v906
    %v908 = vadd.f32 %v905, %v907
    %v910 = vunpack.c.l.s4 1983009808
    %v911 = vunpack.c.0.s8 %v910
    %v912 = vlaneseq
    %v913 = vshrl.u32 %v912, 7
    %v914 = vsub.s32 %v911, %v913
    %v915 = vrot.slane %v643, %v914
    %v916 = vcombine.high %v915, %v915
    %v920 = vunpack.c.l.s4 1983009808
    %v921 = vunpack.c.0.s8 %v920
    %v922 = vlaneseq
    %v923 = vshrl.u32 %v922, 7
    %v924 = vsub.s32 %v921, %v923
    %v925 = vrot.slane %v662, %v924
    %v926 = vcombine.high %v925, %v925
    %v929 = vsel %vm666, %v915, %v925
    %v930 = vsel %vm667, %v916, %v926
    %v931 = vpack.c.bf16 %v908, %v908
    %v933 = vsel %vm741, %v931, 0
    %935 = vmatprep.subr.bf16.mxu0 0
    %936 = vmatpush1.bf16.msra.mxu0 0
    %937 = vmatprep.subr.bf16.mxu0 0
    %938 = vmatpush1.bf16.msra.mxu0 0
    %939 = vmatprep.subr.bf16.mxu0 0
    %940 = vmatpush1.bf16.msra.mxu0 0
    %941 = vmatprep.subr.bf16.mxu0 0
    %942 = vmatpush1.bf16.msra.mxu0 0
    %943 = vmatprep.subr.bf16.mxu0 %v732
    %944 = vmatpush1.bf16.msra.mxu0 %v731
    %945 = vmatprep.subr.bf16.mxu0 %v730
    %946 = vmatpush1.bf16.msra.mxu0 %v729
    %947 = vmatprep.subr.bf16.mxu0 %v728
    %948 = vmatpush1.bf16.msra.mxu0 %v727
    %949 = vmatprep.subr.bf16.mxu0 %v726
    %950 = vmatpush1.bf16.msra.mxu0 %v725
    %951 = vmatprep.subr.bf16.mxu0 0
    %952 = vmatpush2.bf16.msra.mxu0 0
    %953 = vmatprep.subr.bf16.mxu0 0
    %954 = vmatpush2.bf16.msra.mxu0 0
    %955 = vmatprep.subr.bf16.mxu0 0
    %956 = vmatpush2.bf16.msra.mxu0 0
    %957 = vmatprep.subr.bf16.mxu0 0
    %958 = vmatpush2.bf16.msra.mxu0 0
    %959 = vmatprep.subr.bf16.mxu0 0
    %960 = vmatpush2.bf16.msra.mxu0 0
    %961 = vmatprep.subr.bf16.mxu0 0
    %962 = vmatpush2.bf16.msra.mxu0 0
    %963 = vmatprep.subr.bf16.mxu0 0
    %964 = vmatpush2.bf16.msra.mxu0 0
    %965 = vmatprep.subr.bf16.mxu0 0
    %966 = vmatpush2.bf16.msra.mxu0 0
    %967 = vmatprep.mubr.bf16.mxu0 0
    %968 = vmatmul.mubr.bf16.gmra.mxu0 %v933
    %v969 = vpop.f32.mrf.mxu0
    %v970 = vadd.f32 %v694, %v969
    %v971 = vpop.f32.mrf.mxu0
    %v972 = vadd.f32 %v698, %v971
    %v973 = vpop.f32.mrf.mxu0
    %v974 = vpop.f32.mrf.mxu0
    %975 = vdwg.mxu0
    %v976 = vadd.f32 %v929, %v970
    %v977 = vxor.u32 %v976, 2147483648
    %v978 = vmul.f32 %v977, 1.442695
    %v979 = vpow.pop %v978
    %v980 = vadd.f32 %v979, 1.0
    %v981 = vrcp.pop %v980
    %v982 = vmul.f32 1.0, %v981
    %v983 = vmul.f32 %v982, %v972
    %v984 = vadd.f32 %v930, %v983
    %v985 = vtanh.pop %v984
    %v986 = vsub.f32 1.0, %v982
    %988 = vrot.lane.b32.xlu0 %v985, 64
    %v989 = vpop.permute.xlu0 %988
    %v991 = vmul.f32 %v986, %v989
    %993 = vrot.lane.b32.xlu0 %v908, 64
    %v994 = vpop.permute.xlu0 %993
    %v996 = vmul.f32 %v982, %v994
    %v997 = vadd.f32 %v991, %v996
    %999 = vrot.lane.b32.xlu0 %v997, 64
    %v1000 = vpop.permute.xlu0 %999
    %v1002 = vmul.f32 %v432, %v1000
    %v1003 = vmul.f32 %v432, %v908
    %v1004 = vsub.f32 %v908, %v1003
    %v1005 = vadd.f32 %v1002, %v1004
    %v1007 = vunpack.c.l.s4 1983009808
    %v1008 = vunpack.c.0.s8 %v1007
    %v1009 = vlaneseq
    %v1010 = vshrl.u32 %v1009, 7
    %v1011 = vsub.s32 %v1008, %v1010
    %v1012 = vrot.slane %v645, %v1011
    %v1013 = vcombine.high %v1012, %v1012
    %v1017 = vunpack.c.l.s4 1983009808
    %v1018 = vunpack.c.0.s8 %v1017
    %v1019 = vlaneseq
    %v1020 = vshrl.u32 %v1019, 7
    %v1021 = vsub.s32 %v1018, %v1020
    %v1022 = vrot.slane %v654, %v1021
    %v1023 = vcombine.high %v1022, %v1022
    %v1026 = vsel %vm666, %v1012, %v1022
    %v1027 = vsel %vm667, %v1013, %v1023
    %v1028 = vpack.c.bf16 %v1005, %v1005
    %v1030 = vsel %vm741, %v1028, 0
    %1032 = vmatprep.subr.bf16.mxu0 0
    %1033 = vmatpush1.bf16.msra.mxu0 0
    %1034 = vmatprep.subr.bf16.mxu0 0
    %1035 = vmatpush1.bf16.msra.mxu0 0
    %1036 = vmatprep.subr.bf16.mxu0 0
    %1037 = vmatpush1.bf16.msra.mxu0 0
    %1038 = vmatprep.subr.bf16.mxu0 0
    %1039 = vmatpush1.bf16.msra.mxu0 0
    %1040 = vmatprep.subr.bf16.mxu0 %v732
    %1041 = vmatpush1.bf16.msra.mxu0 %v731
    %1042 = vmatprep.subr.bf16.mxu0 %v730
    %1043 = vmatpush1.bf16.msra.mxu0 %v729
    %1044 = vmatprep.subr.bf16.mxu0 %v728
    %1045 = vmatpush1.bf16.msra.mxu0 %v727
    %1046 = vmatprep.subr.bf16.mxu0 %v726
    %1047 = vmatpush1.bf16.msra.mxu0 %v725
    %1048 = vmatprep.subr.bf16.mxu0 0
    %1049 = vmatpush2.bf16.msra.mxu0 0
    %1050 = vmatprep.subr.bf16.mxu0 0
    %1051 = vmatpush2.bf16.msra.mxu0 0
    %1052 = vmatprep.subr.bf16.mxu0 0
    %1053 = vmatpush2.bf16.msra.mxu0 0
    %1054 = vmatprep.subr.bf16.mxu0 0
    %1055 = vmatpush2.bf16.msra.mxu0 0
    %1056 = vmatprep.subr.bf16.mxu0 0
    %1057 = vmatpush2.bf16.msra.mxu0 0
    %1058 = vmatprep.subr.bf16.mxu0 0
    %1059 = vmatpush2.bf16.msra.mxu0 0
    %1060 = vmatprep.subr.bf16.mxu0 0
    %1061 = vmatpush2.bf16.msra.mxu0 0
    %1062 = vmatprep.subr.bf16.mxu0 0
    %1063 = vmatpush2.bf16.msra.mxu0 0
    %1064 = vmatprep.mubr.bf16.mxu0 0
    %1065 = vmatmul.mubr.bf16.gmra.mxu0 %v1030
    %v1066 = vpop.f32.mrf.mxu0
    %v1067 = vadd.f32 %v694, %v1066
    %v1068 = vpop.f32.mrf.mxu0
    %v1069 = vadd.f32 %v698, %v1068
    %v1070 = vpop.f32.mrf.mxu0
    %v1071 = vpop.f32.mrf.mxu0
    %1072 = vdwg.mxu0
    %v1073 = vadd.f32 %v1026, %v1067
    %v1074 = vxor.u32 %v1073, 2147483648
    %v1075 = vmul.f32 %v1074, 1.442695
    %v1076 = vpow.pop %v1075
    %v1077 = vadd.f32 %v1076, 1.0
    %v1078 = vrcp.pop %v1077
    %v1079 = vmul.f32 1.0, %v1078
    %v1080 = vmul.f32 %v1079, %v1069
    %v1081 = vadd.f32 %v1027, %v1080
    %v1082 = vtanh.pop %v1081
    %v1083 = vsub.f32 1.0, %v1079
    %1085 = vrot.lane.b32.xlu0 %v1082, 64
    %v1086 = vpop.permute.xlu0 %1085
    %v1088 = vmul.f32 %v1083, %v1086
    %1090 = vrot.lane.b32.xlu0 %v1005, 64
    %v1091 = vpop.permute.xlu0 %1090
    %v1093 = vmul.f32 %v1079, %v1091
    %v1094 = vadd.f32 %v1088, %v1093
    %1096 = vrot.lane.b32.xlu0 %v1094, 64
    %v1097 = vpop.permute.xlu0 %1096
    %v1099 = vmul.f32 %v443, %v1097
    %v1100 = vmul.f32 %v443, %v1005
    %v1101 = vsub.f32 %v1005, %v1100
    %v1102 = vadd.f32 %v1099, %v1101
    %v1103 = vsel %vm666, %v1022, %v1012
    %v1104 = vsel %vm667, %v1023, %v1013
    %v1105 = vpack.c.bf16 %v1102, %v1102
    %v1107 = vsel %vm741, %v1105, 0
    %1109 = vmatprep.subr.bf16.mxu0 0
    %1110 = vmatpush1.bf16.msra.mxu0 0
    %1111 = vmatprep.subr.bf16.mxu0 0
    %1112 = vmatpush1.bf16.msra.mxu0 0
    %1113 = vmatprep.subr.bf16.mxu0 0
    %1114 = vmatpush1.bf16.msra.mxu0 0
    %1115 = vmatprep.subr.bf16.mxu0 0
    %1116 = vmatpush1.bf16.msra.mxu0 0
    %1117 = vmatprep.subr.bf16.mxu0 %v732
    %1118 = vmatpush1.bf16.msra.mxu0 %v731
    %1119 = vmatprep.subr.bf16.mxu0 %v730
    %1120 = vmatpush1.bf16.msra.mxu0 %v729
    %1121 = vmatprep.subr.bf16.mxu0 %v728
    %1122 = vmatpush1.bf16.msra.mxu0 %v727
    %1123 = vmatprep.subr.bf16.mxu0 %v726
    %1124 = vmatpush1.bf16.msra.mxu0 %v725
    %1125 = vmatprep.subr.bf16.mxu0 0
    %1126 = vmatpush2.bf16.msra.mxu0 0
    %1127 = vmatprep.subr.bf16.mxu0 0
    %1128 = vmatpush2.bf16.msra.mxu0 0
    %1129 = vmatprep.subr.bf16.mxu0 0
    %1130 = vmatpush2.bf16.msra.mxu0 0
    %1131 = vmatprep.subr.bf16.mxu0 0
    %1132 = vmatpush2.bf16.msra.mxu0 0
    %1133 = vmatprep.subr.bf16.mxu0 0
    %1134 = vmatpush2.bf16.msra.mxu0 0
    %1135 = vmatprep.subr.bf16.mxu0 0
    %1136 = vmatpush2.bf16.msra.mxu0 0
    %1137 = vmatprep.subr.bf16.mxu0 0
    %1138 = vmatpush2.bf16.msra.mxu0 0
    %1139 = vmatprep.subr.bf16.mxu0 0
    %1140 = vmatpush2.bf16.msra.mxu0 0
    %1141 = vmatprep.mubr.bf16.mxu0 0
    %1142 = vmatmul.mubr.bf16.gmra.mxu0 %v1107
    %v1143 = vpop.f32.mrf.mxu0
    %v1144 = vadd.f32 %v694, %v1143
    %v1145 = vpop.f32.mrf.mxu0
    %v1146 = vadd.f32 %v698, %v1145
    %v1147 = vpop.f32.mrf.mxu0
    %v1148 = vpop.f32.mrf.mxu0
    %1149 = vdwg.mxu0
    %v1150 = vadd.f32 %v1103, %v1144
    %v1151 = vxor.u32 %v1150, 2147483648
    %v1152 = vmul.f32 %v1151, 1.442695
    %v1153 = vpow.pop %v1152
    %v1154 = vadd.f32 %v1153, 1.0
    %v1155 = vrcp.pop %v1154
    %v1156 = vmul.f32 1.0, %v1155
    %v1157 = vmul.f32 %v1156, %v1146
    %v1158 = vadd.f32 %v1104, %v1157
    %v1159 = vtanh.pop %v1158
    %v1160 = vsub.f32 1.0, %v1156
    %1162 = vrot.lane.b32.xlu0 %v1159, 64
    %v1163 = vpop.permute.xlu0 %1162
    %v1165 = vmul.f32 %v1160, %v1163
    %1167 = vrot.lane.b32.xlu0 %v1102, 64
    %v1168 = vpop.permute.xlu0 %1167
    %v1170 = vmul.f32 %v1156, %v1168
    %v1171 = vadd.f32 %v1165, %v1170
    %1173 = vrot.lane.b32.xlu0 %v1171, 64
    %v1174 = vpop.permute.xlu0 %1173
    %v1176 = vmul.f32 %v444, %v1174
    %v1177 = vmul.f32 %v444, %v1102
    %v1178 = vsub.f32 %v1102, %v1177
    %v1179 = vadd.f32 %v1176, %v1178
    %v1180 = vsel %vm666, %v925, %v915
    %v1181 = vsel %vm667, %v926, %v916
    %v1182 = vpack.c.bf16 %v1179, %v1179
    %v1184 = vsel %vm741, %v1182, 0
    %1186 = vmatprep.subr.bf16.mxu0 0
    %1187 = vmatpush1.bf16.msra.mxu0 0
    %1188 = vmatprep.subr.bf16.mxu0 0
    %1189 = vmatpush1.bf16.msra.mxu0 0
    %1190 = vmatprep.subr.bf16.mxu0 0
    %1191 = vmatpush1.bf16.msra.mxu0 0
    %1192 = vmatprep.subr.bf16.mxu0 0
    %1193 = vmatpush1.bf16.msra.mxu0 0
    %1194 = vmatprep.subr.bf16.mxu0 %v732
    %1195 = vmatpush1.bf16.msra.mxu0 %v731
    %1196 = vmatprep.subr.bf16.mxu0 %v730
    %1197 = vmatpush1.bf16.msra.mxu0 %v729
    %1198 = vmatprep.subr.bf16.mxu0 %v728
    %1199 = vmatpush1.bf16.msra.mxu0 %v727
    %1200 = vmatprep.subr.bf16.mxu0 %v726
    %1201 = vmatpush1.bf16.msra.mxu0 %v725
    %1202 = vmatprep.subr.bf16.mxu0 0
    %1203 = vmatpush2.bf16.msra.mxu0 0
    %1204 = vmatprep.subr.bf16.mxu0 0
    %1205 = vmatpush2.bf16.msra.mxu0 0
    %1206 = vmatprep.subr.bf16.mxu0 0
    %1207 = vmatpush2.bf16.msra.mxu0 0
    %1208 = vmatprep.subr.bf16.mxu0 0
    %1209 = vmatpush2.bf16.msra.mxu0 0
    %1210 = vmatprep.subr.bf16.mxu0 0
    %1211 = vmatpush2.bf16.msra.mxu0 0
    %1212 = vmatprep.subr.bf16.mxu0 0
    %1213 = vmatpush2.bf16.msra.mxu0 0
    %1214 = vmatprep.subr.bf16.mxu0 0
    %1215 = vmatpush2.bf16.msra.mxu0 0
    %1216 = vmatprep.subr.bf16.mxu0 0
    %1217 = vmatpush2.bf16.msra.mxu0 0
    %1218 = vmatprep.mubr.bf16.mxu0 0
    %1219 = vmatmul.mubr.bf16.gmra.mxu0 %v1184
    %v1220 = vpop.f32.mrf.mxu0
    %v1221 = vadd.f32 %v694, %v1220
    %v1222 = vpop.f32.mrf.mxu0
    %v1223 = vadd.f32 %v698, %v1222
    %v1224 = vpop.f32.mrf.mxu0
    %v1225 = vpop.f32.mrf.mxu0
    %1226 = vdwg.mxu0
    %v1227 = vadd.f32 %v1180, %v1221
    %v1228 = vxor.u32 %v1227, 2147483648
    %v1229 = vmul.f32 %v1228, 1.442695
    %v1230 = vpow.pop %v1229
    %v1231 = vadd.f32 %v1230, 1.0
    %v1232 = vrcp.pop %v1231
    %v1233 = vmul.f32 1.0, %v1232
    %v1234 = vmul.f32 %v1233, %v1223
    %v1235 = vadd.f32 %v1181, %v1234
    %v1236 = vtanh.pop %v1235
    %v1237 = vsub.f32 1.0, %v1233
    %1239 = vrot.lane.b32.xlu0 %v1236, 64
    %v1240 = vpop.permute.xlu0 %1239
    %v1242 = vmul.f32 %v1237, %v1240
    %1244 = vrot.lane.b32.xlu0 %v1179, 64
    %v1245 = vpop.permute.xlu0 %1244
    %v1247 = vmul.f32 %v1233, %v1245
    %v1248 = vadd.f32 %v1242, %v1247
    %1250 = vrot.lane.b32.xlu0 %v1248, 64
    %v1251 = vpop.permute.xlu0 %1250
    %v1253 = vmul.f32 %v445, %v1251
    %v1254 = vmul.f32 %v445, %v1179
    %v1255 = vsub.f32 %v1179, %v1254
    %v1256 = vadd.f32 %v1253, %v1255
    %v1257 = vsel %vm666, %v828, %v818
    %v1258 = vsel %vm667, %v829, %v819
    %v1259 = vpack.c.bf16 %v1256, %v1256
    %v1261 = vsel %vm741, %v1259, 0
    %1263 = vmatprep.subr.bf16.mxu0 0
    %1264 = vmatpush1.bf16.msra.mxu0 0
    %1265 = vmatprep.subr.bf16.mxu0 0
    %1266 = vmatpush1.bf16.msra.mxu0 0
    %1267 = vmatprep.subr.bf16.mxu0 0
    %1268 = vmatpush1.bf16.msra.mxu0 0
    %1269 = vmatprep.subr.bf16.mxu0 0
    %1270 = vmatpush1.bf16.msra.mxu0 0
    %1271 = vmatprep.subr.bf16.mxu0 %v732
    %1272 = vmatpush1.bf16.msra.mxu0 %v731
    %1273 = vmatprep.subr.bf16.mxu0 %v730
    %1274 = vmatpush1.bf16.msra.mxu0 %v729
    %1275 = vmatprep.subr.bf16.mxu0 %v728
    %1276 = vmatpush1.bf16.msra.mxu0 %v727
    %1277 = vmatprep.subr.bf16.mxu0 %v726
    %1278 = vmatpush1.bf16.msra.mxu0 %v725
    %1279 = vmatprep.subr.bf16.mxu0 0
    %1280 = vmatpush2.bf16.msra.mxu0 0
    %1281 = vmatprep.subr.bf16.mxu0 0
    %1282 = vmatpush2.bf16.msra.mxu0 0
    %1283 = vmatprep.subr.bf16.mxu0 0
    %1284 = vmatpush2.bf16.msra.mxu0 0
    %1285 = vmatprep.subr.bf16.mxu0 0
    %1286 = vmatpush2.bf16.msra.mxu0 0
    %1287 = vmatprep.subr.bf16.mxu0 0
    %1288 = vmatpush2.bf16.msra.mxu0 0
    %1289 = vmatprep.subr.bf16.mxu0 0
    %1290 = vmatpush2.bf16.msra.mxu0 0
    %1291 = vmatprep.subr.bf16.mxu0 0
    %1292 = vmatpush2.bf16.msra.mxu0 0
    %1293 = vmatprep.subr.bf16.mxu0 0
    %1294 = vmatpush2.bf16.msra.mxu0 0
    %1295 = vmatprep.mubr.bf16.mxu0 0
    %1296 = vmatmul.mubr.bf16.gmra.mxu0 %v1261
    %v1297 = vpop.f32.mrf.mxu0
    %v1298 = vadd.f32 %v694, %v1297
    %v1299 = vpop.f32.mrf.mxu0
    %v1300 = vadd.f32 %v698, %v1299
    %v1301 = vpop.f32.mrf.mxu0
    %v1302 = vpop.f32.mrf.mxu0
    %1303 = vdwg.mxu0
    %v1304 = vadd.f32 %v1257, %v1298
    %v1305 = vxor.u32 %v1304, 2147483648
    %v1306 = vmul.f32 %v1305, 1.442695
    %v1307 = vpow.pop %v1306
    %v1308 = vadd.f32 %v1307, 1.0
    %v1309 = vrcp.pop %v1308
    %v1310 = vmul.f32 1.0, %v1309
    %v1311 = vmul.f32 %v1310, %v1300
    %v1312 = vadd.f32 %v1258, %v1311
    %v1313 = vtanh.pop %v1312
    %v1314 = vsub.f32 1.0, %v1310
    %1316 = vrot.lane.b32.xlu0 %v1313, 64
    %v1317 = vpop.permute.xlu0 %1316
    %v1319 = vmul.f32 %v1314, %v1317
    %1321 = vrot.lane.b32.xlu0 %v1256, 64
    %v1322 = vpop.permute.xlu0 %1321
    %v1324 = vmul.f32 %v1310, %v1322
    %v1325 = vadd.f32 %v1319, %v1324
    %1327 = vrot.lane.b32.xlu0 %v1325, 64
    %v1328 = vpop.permute.xlu0 %1327
    %v1330 = vmul.f32 %v446, %v1328
    %v1331 = vmul.f32 %v446, %v1256
    %v1332 = vsub.f32 %v1256, %v1331
    %v1333 = vadd.f32 %v1330, %v1332
    %v1334 = vsel %vm666, %v684, %v674
    %v1335 = vsel %vm667, %v685, %v675
    %v1336 = vpack.c.bf16 %v1333, %v1333
    %v1338 = vsel %vm741, %v1336, 0
    %1340 = vmatprep.subr.bf16.mxu0 0
    %1341 = vmatpush1.bf16.msra.mxu0 0
    %1342 = vmatprep.subr.bf16.mxu0 0
    %1343 = vmatpush1.bf16.msra.mxu0 0
    %1344 = vmatprep.subr.bf16.mxu0 0
    %1345 = vmatpush1.bf16.msra.mxu0 0
    %1346 = vmatprep.subr.bf16.mxu0 0
    %1347 = vmatpush1.bf16.msra.mxu0 0
    %1348 = vmatprep.subr.bf16.mxu0 %v732
    %1349 = vmatpush1.bf16.msra.mxu0 %v731
    %1350 = vmatprep.subr.bf16.mxu0 %v730
    %1351 = vmatpush1.bf16.msra.mxu0 %v729
    %1352 = vmatprep.subr.bf16.mxu0 %v728
    %1353 = vmatpush1.bf16.msra.mxu0 %v727
    %1354 = vmatprep.subr.bf16.mxu0 %v726
    %1355 = vmatpush1.bf16.msra.mxu0 %v725
    %1356 = vmatprep.subr.bf16.mxu0 0
    %1357 = vmatpush2.bf16.msra.mxu0 0
    %1358 = vmatprep.subr.bf16.mxu0 0
    %1359 = vmatpush2.bf16.msra.mxu0 0
    %1360 = vmatprep.subr.bf16.mxu0 0
    %1361 = vmatpush2.bf16.msra.mxu0 0
    %1362 = vmatprep.subr.bf16.mxu0 0
    %1363 = vmatpush2.bf16.msra.mxu0 0
    %1364 = vmatprep.subr.bf16.mxu0 0
    %1365 = vmatpush2.bf16.msra.mxu0 0
    %1366 = vmatprep.subr.bf16.mxu0 0
    %1367 = vmatpush2.bf16.msra.mxu0 0
    %1368 = vmatprep.subr.bf16.mxu0 0
    %1369 = vmatpush2.bf16.msra.mxu0 0
    %1370 = vmatprep.subr.bf16.mxu0 0
    %1371 = vmatpush2.bf16.msra.mxu0 0
    %1372 = vmatprep.mubr.bf16.mxu0 0
    %1373 = vmatmul.mubr.bf16.gmra.mxu0 %v1338
    %v1374 = vpop.f32.mrf.mxu0
    %v1375 = vadd.f32 %v694, %v1374
    %v1376 = vpop.f32.mrf.mxu0
    %v1377 = vadd.f32 %v698, %v1376
    %v1378 = vpop.f32.mrf.mxu0
    %v1379 = vpop.f32.mrf.mxu0
    %1380 = vdwg.mxu0
    %v1381 = vadd.f32 %v1334, %v1375
    %v1382 = vxor.u32 %v1381, 2147483648
    %v1383 = vmul.f32 %v1382, 1.442695
    %v1384 = vpow.pop %v1383
    %v1385 = vadd.f32 %v1384, 1.0
    %v1386 = vrcp.pop %v1385
    %v1387 = vmul.f32 1.0, %v1386
    %v1388 = vmul.f32 %v1387, %v1377
    %v1389 = vadd.f32 %v1335, %v1388
    %v1390 = vtanh.pop %v1389
    %v1391 = vsub.f32 1.0, %v1387
    %1393 = vrot.lane.b32.xlu0 %v1390, 64
    %v1394 = vpop.permute.xlu0 %1393
    %v1396 = vmul.f32 %v1391, %v1394
    %1398 = vrot.lane.b32.xlu0 %v1333, 64
    %v1399 = vpop.permute.xlu0 %1398
    %v1401 = vmul.f32 %v1387, %v1399
    %v1402 = vadd.f32 %v1396, %v1401
    %1404 = vrot.lane.b32.xlu0 %v1402, 64
    %v1405 = vpop.permute.xlu0 %1404
    %v1407 = vmul.f32 %v447, %v1405
    %v1408 = vsel %vm409, %v808, %v1407
    %v1409 = vsel %vm409, %v905, %v1330
    %v1410 = vsel %vm409, %v1002, %v1253
    %v1411 = vsel %vm409, %v1099, %v1176
    %v1412 = vsel %vm409, %v1176, %v1099
    %v1413 = vsel %vm409, %v1253, %v1002
    %v1414 = vsel %vm409, %v1330, %v905
    %v1415 = vsel %vm409, %v1407, %v808
    %v1416 = vld [vmem:[%s9] sm:$0x1]
    %v1417 = vld [vmem:[%s9 + $0x1] sm:$0x1]
    %v1418 = vld [vmem:[%s9 + $0x2] sm:$0x1]
    %v1419 = vld [vmem:[%s9 + $0x3] sm:$0x1]
    %v1420 = vpack.c.bf16 %v1408, %v1408
    %v1421 = vpack.c.bf16 %v1409, %v1409
    %v1422 = vpack.c.bf16 %v1410, %v1410
    %v1423 = vpack.c.bf16 %v1411, %v1411
    %v1424 = vpack.c.bf16 %v1412, %v1412
    %v1425 = vpack.c.bf16 %v1413, %v1413
    %v1426 = vpack.c.bf16 %v1414, %v1414
    %v1427 = vpack.c.bf16 %v1415, %v1415
    %v1428 = vld [vmem:[%s7] sm:$0xf]
    %v1429 = vld [vmem:[%s7 + $0x4] sm:$0xf]
    %v1430 = vld [vmem:[%s7 + $0x8] sm:$0xf]
    %v1431 = vld [vmem:[%s7 + $0xc] sm:$0xf]
    %v1432 = vld [vmem:[%s7 + $0x10] sm:$0xf]
    %v1433 = vld [vmem:[%s7 + $0x14] sm:$0xf]
    %v1434 = vld [vmem:[%s7 + $0x18] sm:$0xf]
    %v1435 = vld [vmem:[%s7 + $0x1c] sm:$0xf]
    %v1436 = vlaneseq
    %v1437 = vshrl.u32 %v1436, 7
    %v1438 = vsub.s32 0, %v1437
    %v1439 = vrot.slane %v1416, %v1438
    %v1448 = vcombine.low %v1420, %v1421
    %v1449 = vcombine.low %v1422, %v1423
    %v1450 = vcombine.low %v1424, %v1425
    %v1451 = vcombine.low %v1426, %v1427
    %v1453 = vunpack.c.l.s4 1966171168
    %v1454 = vunpack.c.0.s8 %v1453
    %v1455 = vlaneseq
    %v1456 = vshrl.u32 %v1455, 7
    %v1457 = vsub.s32 %v1454, %v1456
    %v1458 = vrot.slane %v1448, %v1457
    %v1460 = vunpack.c.l.s4 1966171168
    %v1461 = vunpack.c.0.s8 %v1460
    %v1462 = vlaneseq
    %v1463 = vshrl.u32 %v1462, 7
    %v1464 = vsub.s32 %v1461, %v1463
    %v1465 = vrot.slane %v1449, %v1464
    %v1467 = vunpack.c.l.s4 1966171168
    %v1468 = vunpack.c.0.s8 %v1467
    %v1469 = vlaneseq
    %v1470 = vshrl.u32 %v1469, 7
    %v1471 = vsub.s32 %v1468, %v1470
    %v1472 = vrot.slane %v1450, %v1471
    %v1474 = vunpack.c.l.s4 1966171168
    %v1475 = vunpack.c.0.s8 %v1474
    %v1476 = vlaneseq
    %v1477 = vshrl.u32 %v1476, 7
    %v1478 = vsub.s32 %v1475, %v1477
    %v1479 = vrot.slane %v1451, %v1478
    %v1480 = vcombine.low %v1458, %v1465
    %v1481 = vcombine.low %v1472, %v1479
    %v1483 = vunpack.c.l.s4 1966171168
    %v1484 = vunpack.c.0.s8 %v1483
    %v1485 = vlaneseq
    %v1486 = vshrl.u32 %v1485, 7
    %v1487 = vsub.s32 %v1484, %v1486
    %v1488 = vrot.slane %v1480, %v1487
    %v1490 = vunpack.c.l.s4 1966171168
    %v1491 = vunpack.c.0.s8 %v1490
    %v1492 = vlaneseq
    %v1493 = vshrl.u32 %v1492, 7
    %v1494 = vsub.s32 %v1491, %v1493
    %v1495 = vrot.slane %v1481, %v1494
    %v1496 = vcombine.low %v1488, %v1495
    %v1505 = vunpack.c.l.b16 %v1428
    %v1506 = vunpack.c.l.b16 %v1429
    %v1507 = vunpack.c.l.b16 %v1430
    %v1508 = vunpack.c.l.b16 %v1431
    %v1509 = vunpack.c.l.b16 %v1432
    %v1510 = vunpack.c.l.b16 %v1433
    %v1511 = vunpack.c.l.b16 %v1434
    %v1512 = vunpack.c.l.b16 %v1435
    %v1513 = vpack.c.b16 %v1506, %v1505
    %v1514 = vpack.c.b16 %v1508, %v1507
    %v1515 = vpack.c.b16 %v1510, %v1509
    %v1516 = vpack.c.b16 %v1512, %v1511
    %v1522 = vcombine.low %v1439, %v1439
    %v1524 = vunpack.c.l.s4 1983009808
    %v1525 = vunpack.c.0.s8 %v1524
    %v1526 = vlaneseq
    %v1527 = vshrl.u32 %v1526, 7
    %v1528 = vsub.s32 %v1525, %v1527
    %v1529 = vrot.slane %v1522, %v1528
    %v1530 = vcombine.low %v1529, %v1529
    %v1533 = vsel %vm741, %v1496, 0
    %1535 = vmatprep.subr.bf16.mxu0 0
    %1536 = vmatpush1.bf16.msra.mxu0 0
    %1537 = vmatprep.subr.bf16.mxu0 0
    %1538 = vmatpush1.bf16.msra.mxu0 0
    %1539 = vmatprep.subr.bf16.mxu0 0
    %1540 = vmatpush1.bf16.msra.mxu0 0
    %1541 = vmatprep.subr.bf16.mxu0 0
    %1542 = vmatpush1.bf16.msra.mxu0 0
    %1543 = vmatprep.subr.bf16.mxu0 0
    %1544 = vmatpush1.bf16.msra.mxu0 %v1516
    %1545 = vmatprep.subr.bf16.mxu0 0
    %1546 = vmatpush1.bf16.msra.mxu0 %v1515
    %1547 = vmatprep.subr.bf16.mxu0 0
    %1548 = vmatpush1.bf16.msra.mxu0 %v1514
    %1549 = vmatprep.subr.bf16.mxu0 0
    %1550 = vmatpush1.bf16.msra.mxu0 %v1513
    %1551 = vmatprep.subr.bf16.mxu0 0
    %1552 = vmatpush2.bf16.msra.mxu0 0
    %1553 = vmatprep.subr.bf16.mxu0 0
    %1554 = vmatpush2.bf16.msra.mxu0 0
    %1555 = vmatprep.subr.bf16.mxu0 0
    %1556 = vmatpush2.bf16.msra.mxu0 0
    %1557 = vmatprep.subr.bf16.mxu0 0
    %1558 = vmatpush2.bf16.msra.mxu0 0
    %1559 = vmatprep.subr.bf16.mxu0 0
    %1560 = vmatpush2.bf16.msra.mxu0 0
    %1561 = vmatprep.subr.bf16.mxu0 0
    %1562 = vmatpush2.bf16.msra.mxu0 0
    %1563 = vmatprep.subr.bf16.mxu0 0
    %1564 = vmatpush2.bf16.msra.mxu0 0
    %1565 = vmatprep.subr.bf16.mxu0 0
    %1566 = vmatpush2.bf16.msra.mxu0 0
    %1567 = vmatprep.mubr.bf16.mxu0 0
    %1568 = vmatmul.mubr.bf16.gmra.mxu0 %v1533
    %v1569 = vpop.f32.mrf.mxu0
    %v1570 = vadd.f32 %v1530, %v1569
    %v1571 = vpop.f32.mrf.mxu0
    %v1572 = vpop.f32.mrf.mxu0
    %v1573 = vadd.f32 %v1530, %v1572
    %v1574 = vpop.f32.mrf.mxu0
    %1575 = vdwg.mxu0
    %v1578 = vcombine.high %v1570, %v1570
    %v1580 = vunpack.c.l.s4 1983009808
    %v1581 = vunpack.c.0.s8 %v1580
    %v1582 = vlaneseq
    %v1583 = vshrl.u32 %v1582, 7
    %v1584 = vsub.s32 %v1581, %v1583
    %v1585 = vrot.slane %v1570, %v1584
    %v1587 = vunpack.c.l.s4 1983009808
    %v1588 = vunpack.c.0.s8 %v1587
    %v1589 = vlaneseq
    %v1590 = vshrl.u32 %v1589, 7
    %v1591 = vsub.s32 %v1588, %v1590
    %v1592 = vrot.slane %v1578, %v1591
    %v1593 = vcombine.high %v1585, %v1585
    %v1594 = vcombine.high %v1592, %v1592
    %v1595 = vcombine.high %v1573, %v1573
    %v1597 = vunpack.c.l.s4 1983009808
    %v1598 = vunpack.c.0.s8 %v1597
    %v1599 = vlaneseq
    %v1600 = vshrl.u32 %v1599, 7
    %v1601 = vsub.s32 %v1598, %v1600
    %v1602 = vrot.slane %v1573, %v1601
    %v1604 = vunpack.c.l.s4 1983009808
    %v1605 = vunpack.c.0.s8 %v1604
    %v1606 = vlaneseq
    %v1607 = vshrl.u32 %v1606, 7
    %v1608 = vsub.s32 %v1605, %v1607
    %v1609 = vrot.slane %v1595, %v1608
    %v1610 = vcombine.high %v1602, %v1602
    %v1611 = vcombine.high %v1609, %v1609
    %v1620 = vmax.f32 %v1585, 0.0
    %v1621 = vmax.f32 %v1593, 0.0
    %v1622 = vmax.f32 %v1592, 0.0
    %v1623 = vmax.f32 %v1594, 0.0
    %v1624 = vmax.f32 %v1602, 0.0
    %v1625 = vmax.f32 %v1610, 0.0
    %v1626 = vmax.f32 %v1609, 0.0
    %v1627 = vmax.f32 %v1611, 0.0
    %v1628 = vmul.f32 %v1620, %v401
    %v1629 = vmul.f32 %v1621, %v414
    %v1630 = vmul.f32 %v1622, %v425
    %v1631 = vmul.f32 %v1623, %v436
    %v1632 = vmul.f32 %v1624, %v441
    %v1633 = vmul.f32 %v1625, %v430
    %v1634 = vmul.f32 %v1626, %v419
    %v1635 = vmul.f32 %v1627, %v406
    %v1636 = vpack.c.bf16 %v1628, %v1628
    %v1637 = vpack.c.bf16 %v1629, %v1629
    %v1638 = vpack.c.bf16 %v1630, %v1630
    %v1639 = vpack.c.bf16 %v1631, %v1631
    %v1640 = vpack.c.bf16 %v1632, %v1632
    %v1641 = vpack.c.bf16 %v1633, %v1633
    %v1642 = vpack.c.bf16 %v1634, %v1634
    %v1643 = vpack.c.bf16 %v1635, %v1635
    %v1644 = vpack.c.bf16 %v359, %v359
    %v1645 = vld [vmem:[#allocation7] sm:$0xf]
    %v1646 = vld [vmem:[#allocation7 + $0x4] sm:$0xf]
    %v1647 = vld [vmem:[#allocation7 + $0x8] sm:$0xf]
    %v1648 = vld [vmem:[#allocation7 + $0xc] sm:$0xf]
    %v1649 = vlaneseq
    %v1650 = vshrl.u32 %v1649, 7
    %v1651 = vsub.s32 0, %v1650
    %v1652 = vrot.slane %v1417, %v1651
    %v1662 = vcombine.low %v1636, %v1637
    %v1663 = vcombine.low %v1638, %v1639
    %v1664 = vcombine.low %v1640, %v1641
    %v1665 = vcombine.low %v1642, %v1643
    %v1667 = vunpack.c.l.s4 1966171168
    %v1668 = vunpack.c.0.s8 %v1667
    %v1669 = vlaneseq
    %v1670 = vshrl.u32 %v1669, 7
    %v1671 = vsub.s32 %v1668, %v1670
    %v1672 = vrot.slane %v1662, %v1671
    %v1674 = vunpack.c.l.s4 1966171168
    %v1675 = vunpack.c.0.s8 %v1674
    %v1676 = vlaneseq
    %v1677 = vshrl.u32 %v1676, 7
    %v1678 = vsub.s32 %v1675, %v1677
    %v1679 = vrot.slane %v1663, %v1678
    %v1681 = vunpack.c.l.s4 1966171168
    %v1682 = vunpack.c.0.s8 %v1681
    %v1683 = vlaneseq
    %v1684 = vshrl.u32 %v1683, 7
    %v1685 = vsub.s32 %v1682, %v1684
    %v1686 = vrot.slane %v1664, %v1685
    %v1688 = vunpack.c.l.s4 1966171168
    %v1689 = vunpack.c.0.s8 %v1688
    %v1690 = vlaneseq
    %v1691 = vshrl.u32 %v1690, 7
    %v1692 = vsub.s32 %v1689, %v1691
    %v1693 = vrot.slane %v1665, %v1692
    %v1694 = vcombine.low %v1672, %v1679
    %v1695 = vcombine.low %v1686, %v1693
    %v1697 = vunpack.c.l.s4 1966171168
    %v1698 = vunpack.c.0.s8 %v1697
    %v1699 = vlaneseq
    %v1700 = vshrl.u32 %v1699, 7
    %v1701 = vsub.s32 %v1698, %v1700
    %v1702 = vrot.slane %v1694, %v1701
    %v1704 = vunpack.c.l.s4 1966171168
    %v1705 = vunpack.c.0.s8 %v1704
    %v1706 = vlaneseq
    %v1707 = vshrl.u32 %v1706, 7
    %v1708 = vsub.s32 %v1705, %v1707
    %v1709 = vrot.slane %v1695, %v1708
    %v1710 = vcombine.low %v1702, %v1709
    %v1712 = vunpack.c.l.s4 1966171168
    %v1713 = vunpack.c.0.s8 %v1712
    %v1714 = vlaneseq
    %v1715 = vshrl.u32 %v1714, 7
    %v1716 = vsub.s32 %v1713, %v1715
    %v1717 = vrot.slane %v1644, %v1716
    %v1719 = vunpack.c.l.s4 1966171168
    %v1720 = vunpack.c.0.s8 %v1719
    %v1721 = vlaneseq
    %v1722 = vshrl.u32 %v1721, 7
    %v1723 = vsub.s32 %v1720, %v1722
    %v1724 = vrot.slane %v1717, %v1723
    %v1729 = vunpack.c.l.b16 %v1645
    %v1730 = vunpack.c.l.b16 %v1646
    %v1731 = vunpack.c.l.b16 %v1647
    %v1732 = vunpack.c.l.b16 %v1648
    %v1733 = vpack.c.b16 %v1730, %v1729
    %v1734 = vpack.c.b16 %v1732, %v1731
    %v1738 = vcombine.low %v1652, %v1652
    %v1740 = vunpack.c.l.s4 1983009808
    %v1741 = vunpack.c.0.s8 %v1740
    %v1742 = vlaneseq
    %v1743 = vshrl.u32 %v1742, 7
    %v1744 = vsub.s32 %v1741, %v1743
    %v1745 = vrot.slane %v1738, %v1744
    %v1746 = vcombine.low %v1745, %v1745
    %v1748 = vunpack.c.l.s4 1983009808
    %v1749 = vunpack.c.0.s8 %v1748
    %v1750 = vlaneseq
    %v1751 = vshrl.u32 %v1750, 7
    %v1752 = vsub.s32 %v1749, %v1751
    %v1753 = vrot.slane %v1652, %v1752
    %v1757 = vsel %vm577, %v1710, 0
    %v1760 = vsel %vm577, %v1724, 0
    %1762 = vmatprep.subr.bf16.mxu0 0
    %1763 = vmatpush1.bf16.msra.mxu0 0
    %1764 = vmatprep.subr.bf16.mxu0 0
    %1765 = vmatpush1.bf16.msra.mxu0 0
    %1766 = vmatprep.subr.bf16.mxu0 0
    %1767 = vmatpush1.bf16.msra.mxu0 0
    %1768 = vmatprep.subr.bf16.mxu0 0
    %1769 = vmatpush1.bf16.msra.mxu0 0
    %1770 = vmatprep.subr.bf16.mxu0 0
    %1771 = vmatpush1.bf16.msra.mxu0 0
    %1772 = vmatprep.subr.bf16.mxu0 0
    %1773 = vmatpush1.bf16.msra.mxu0 0
    %1774 = vmatprep.subr.bf16.mxu0 0
    %1775 = vmatpush1.bf16.msra.mxu0 %v1734
    %1776 = vmatprep.subr.bf16.mxu0 0
    %1777 = vmatpush1.bf16.msra.mxu0 %v1733
    %1778 = vmatprep.subr.bf16.mxu0 0
    %1779 = vmatpush2.bf16.msra.mxu0 0
    %1780 = vmatprep.subr.bf16.mxu0 0
    %1781 = vmatpush2.bf16.msra.mxu0 0
    %1782 = vmatprep.subr.bf16.mxu0 0
    %1783 = vmatpush2.bf16.msra.mxu0 0
    %1784 = vmatprep.subr.bf16.mxu0 0
    %1785 = vmatpush2.bf16.msra.mxu0 0
    %1786 = vmatprep.subr.bf16.mxu0 0
    %1787 = vmatpush2.bf16.msra.mxu0 0
    %1788 = vmatprep.subr.bf16.mxu0 0
    %1789 = vmatpush2.bf16.msra.mxu0 0
    %1790 = vmatprep.subr.bf16.mxu0 0
    %1791 = vmatpush2.bf16.msra.mxu0 0
    %1792 = vmatprep.subr.bf16.mxu0 0
    %1793 = vmatpush2.bf16.msra.mxu0 0
    %1794 = vmatprep.mubr.bf16.mxu0 0
    %1795 = vmatmul.mubr.bf16.gmra.mxu0 %v1757
    %v1796 = vpop.f32.mrf.mxu0
    %v1797 = vadd.f32 %v1746, %v1796
    %v1798 = vpop.f32.mrf.mxu0
    %v1799 = vpop.f32.mrf.mxu0
    %v1800 = vadd.f32 %v1746, %v1799
    %v1801 = vpop.f32.mrf.mxu0
    %1802 = vmatprep.mubr.bf16.mxu0 0
    %1803 = vmatmul.mubr.bf16.gmra.mxu0 %v1760
    %v1804 = vpop.f32.mrf.mxu0
    %v1805 = vadd.f32 %v1753, %v1804
    %v1806 = vpop.f32.mrf.mxu0
    %v1807 = vpop.f32.mrf.mxu0
    %v1808 = vpop.f32.mrf.mxu0
    %1809 = vdwg.mxu0
    %v1813 = vcombine.high %v1797, %v1797
    %v1815 = vunpack.c.l.s4 1983009808
    %v1816 = vunpack.c.0.s8 %v1815
    %v1817 = vlaneseq
    %v1818 = vshrl.u32 %v1817, 7
    %v1819 = vsub.s32 %v1816, %v1818
    %v1820 = vrot.slane %v1797, %v1819
    %v1822 = vunpack.c.l.s4 1983009808
    %v1823 = vunpack.c.0.s8 %v1822
    %v1824 = vlaneseq
    %v1825 = vshrl.u32 %v1824, 7
    %v1826 = vsub.s32 %v1823, %v1825
    %v1827 = vrot.slane %v1813, %v1826
    %v1828 = vcombine.high %v1820, %v1820
    %v1829 = vcombine.high %v1827, %v1827
    %v1830 = vcombine.high %v1800, %v1800
    %v1832 = vunpack.c.l.s4 1983009808
    %v1833 = vunpack.c.0.s8 %v1832
    %v1834 = vlaneseq
    %v1835 = vshrl.u32 %v1834, 7
    %v1836 = vsub.s32 %v1833, %v1835
    %v1837 = vrot.slane %v1800, %v1836
    %v1839 = vunpack.c.l.s4 1983009808
    %v1840 = vunpack.c.0.s8 %v1839
    %v1841 = vlaneseq
    %v1842 = vshrl.u32 %v1841, 7
    %v1843 = vsub.s32 %v1840, %v1842
    %v1844 = vrot.slane %v1830, %v1843
    %v1845 = vcombine.high %v1837, %v1837
    %v1846 = vcombine.high %v1844, %v1844
    %v1848 = vunpack.c.l.s4 1983009808
    %v1849 = vunpack.c.0.s8 %v1848
    %v1850 = vlaneseq
    %v1851 = vshrl.u32 %v1850, 7
    %v1852 = vsub.s32 %v1849, %v1851
    %v1853 = vrot.slane %v1805, %v1852
    %v1863 = vlaneseq
    %v1864 = vshrl.u32 %v1863, 7
    %v1865 = vsub.s32 0, %v1864
    %v1866 = vrot.slane %v1418, %v1865
    %v1867 = vmul.f32 %v1820, %v1866
    %v1868 = vmul.f32 %v1828, %v1866
    %v1869 = vmul.f32 %v1827, %v1866
    %v1870 = vmul.f32 %v1829, %v1866
    %v1871 = vmul.f32 %v1837, %v1866
    %v1872 = vmul.f32 %v1845, %v1866
    %v1873 = vmul.f32 %v1844, %v1866
    %v1874 = vmul.f32 %v1846, %v1866
    %v1875 = vmul.f32 %v1853, %v1866
    %vm1876 = vcmask 254976
    %v1877 = vsel %vm1876, %v1867, 0.0
    %1878 = vadd.xlane.f32.xlu0 %v1877
    %v1879 = vpop.xlane.xlu0 %1878
    %v1880 = vsel %vm1876, %v1868, 0.0
    %1881 = vadd.xlane.f32.xlu0 %v1880
    %v1882 = vpop.xlane.xlu0 %1881
    %v1883 = vsel %vm1876, %v1869, 0.0
    %1884 = vadd.xlane.f32.xlu0 %v1883
    %v1885 = vpop.xlane.xlu0 %1884
    %v1886 = vsel %vm1876, %v1870, 0.0
    %1887 = vadd.xlane.f32.xlu0 %v1886
    %v1888 = vpop.xlane.xlu0 %1887
    %v1889 = vsel %vm1876, %v1871, 0.0
    %1890 = vadd.xlane.f32.xlu0 %v1889
    %v1891 = vpop.xlane.xlu0 %1890
    %v1892 = vsel %vm1876, %v1872, 0.0
    %1893 = vadd.xlane.f32.xlu0 %v1892
    %v1894 = vpop.xlane.xlu0 %1893
    %v1895 = vsel %vm1876, %v1873, 0.0
    %1896 = vadd.xlane.f32.xlu0 %v1895
    %v1897 = vpop.xlane.xlu0 %1896
    %v1898 = vsel %vm1876, %v1874, 0.0
    %1899 = vadd.xlane.f32.xlu0 %v1898
    %v1900 = vpop.xlane.xlu0 %1899
    %v1901 = vsel %vm1876, %v1875, 0.0
    %1902 = vadd.xlane.f32.xlu0 %v1901
    %v1903 = vpop.xlane.xlu0 %1902
    %v1904 = vlaneseq
    %v1905 = vshrl.u32 %v1904, 7
    %v1906 = vsub.s32 0, %v1905
    %v1907 = vrot.slane %v1419, %v1906
    %v1908 = vadd.f32 %v1879, %v1907
    %v1909 = vadd.f32 %v1882, %v1907
    %v1910 = vadd.f32 %v1885, %v1907
    %v1911 = vadd.f32 %v1888, %v1907
    %v1912 = vadd.f32 %v1891, %v1907
    %v1913 = vadd.f32 %v1894, %v1907
    %v1914 = vadd.f32 %v1897, %v1907
    %v1915 = vadd.f32 %v1900, %v1907
    %v1916 = vadd.f32 %v1903, %v1907
    %vm1917 = vcmask 1024
    %v1918 = vsel %vm1917, %v1908, -inf
    %v1919 = vsel %vm1917, %v1909, -inf
    %v1920 = vsel %vm1917, %v1910, -inf
    %v1921 = vsel %vm1917, %v1911, -inf
    %v1922 = vsel %vm1917, %v1912, -inf
    %v1923 = vmax.f32 %v1918, %v1922
    %v1924 = vsel %vm1917, %v1913, -inf
    %v1925 = vmax.f32 %v1919, %v1924
    %v1926 = vsel %vm1917, %v1914, -inf
    %v1927 = vmax.f32 %v1920, %v1926
    %v1928 = vsel %vm1917, %v1915, -inf
    %v1929 = vmax.f32 %v1921, %v1928
    %v1930 = vmax.f32 %v1923, %v1925
    %v1931 = vmax.f32 %v1927, %v1929
    %v1932 = vmax.f32 %v1930, %v1931
    %v1933 = vmax.f32 %v1932, %v1916
    %v1934 = vsub.f32 %v1908, %v1933
    %v1935 = vsub.f32 %v1909, %v1933
    %v1936 = vsub.f32 %v1910, %v1933
    %v1937 = vsub.f32 %v1911, %v1933
    %v1938 = vsub.f32 %v1912, %v1933
    %v1939 = vsub.f32 %v1913, %v1933
    %v1940 = vsub.f32 %v1914, %v1933
    %v1941 = vsub.f32 %v1915, %v1933
    %v1942 = vmul.f32 %v1934, 1.442695
    %v1943 = vpow.pop %v1942
    %v1944 = vmul.f32 %v1935, 1.442695
    %v1945 = vpow.pop %v1944
    %v1946 = vmul.f32 %v1936, 1.442695
    %v1947 = vpow.pop %v1946
    %v1948 = vmul.f32 %v1937, 1.442695
    %v1949 = vpow.pop %v1948
    %v1950 = vmul.f32 %v1938, 1.442695
    %v1951 = vpow.pop %v1950
    %v1952 = vmul.f32 %v1939, 1.442695
    %v1953 = vpow.pop %v1952
    %v1954 = vmul.f32 %v1940, 1.442695
    %v1955 = vpow.pop %v1954
    %v1956 = vmul.f32 %v1941, 1.442695
    %v1957 = vpow.pop %v1956
    %v1958 = vsub.f32 %v1916, %v1933
    %v1959 = vmul.f32 %v1958, 1.442695
    %v1960 = vpow.pop %v1959
    %v1961 = vsel %vm1917, %v1943, 0.0
    %v1962 = vsel %vm1917, %v1945, 0.0
    %v1963 = vadd.f32 %v1961, %v1962
    %v1964 = vsel %vm1917, %v1947, 0.0
    %v1965 = vadd.f32 %v1963, %v1964
    %v1966 = vsel %vm1917, %v1949, 0.0
    %v1967 = vadd.f32 %v1965, %v1966
    %v1968 = vsel %vm1917, %v1951, 0.0
    %v1969 = vadd.f32 %v1967, %v1968
    %v1970 = vsel %vm1917, %v1953, 0.0
    %v1971 = vadd.f32 %v1969, %v1970
    %v1972 = vsel %vm1917, %v1955, 0.0
    %v1973 = vadd.f32 %v1971, %v1972
    %v1974 = vsel %vm1917, %v1957, 0.0
    %v1975 = vadd.f32 %v1973, %v1974
    %v1976 = vadd.f32 %v1960, %v1975
    %1978 = vset.pattern.permute.xlu0 0
    %1979 = vperm.xlu0 %1978, %v1960
    %v1980 = vpop.permute.xlu0 %1979
    %v1982 = vmul.f32 %v1980, %v1853
    %1984 = vset.pattern.permute.xlu0 0
    %1985 = vperm.xlu0 %1984, %v1943
    %v1986 = vpop.permute.xlu0 %1985
    %1989 = vset.pattern.permute.xlu0 0
    %1990 = vperm.xlu0 %1989, %v1945
    %v1991 = vpop.permute.xlu0 %1990
    %1994 = vset.pattern.permute.xlu0 0
    %1995 = vperm.xlu0 %1994, %v1947
    %v1996 = vpop.permute.xlu0 %1995
    %1999 = vset.pattern.permute.xlu0 0
    %2000 = vperm.xlu0 %1999, %v1949
    %v2001 = vpop.permute.xlu0 %2000
    %2004 = vset.pattern.permute.xlu0 0
    %2005 = vperm.xlu0 %2004, %v1951
    %v2006 = vpop.permute.xlu0 %2005
    %2009 = vset.pattern.permute.xlu0 0
    %2010 = vperm.xlu0 %2009, %v1953
    %v2011 = vpop.permute.xlu0 %2010
    %2014 = vset.pattern.permute.xlu0 0
    %2015 = vperm.xlu0 %2014, %v1955
    %v2016 = vpop.permute.xlu0 %2015
    %2019 = vset.pattern.permute.xlu0 0
    %2020 = vperm.xlu0 %2019, %v1957
    %v2021 = vpop.permute.xlu0 %2020
    %v2023 = vmul.f32 %v1986, %v1820
    %v2024 = vmul.f32 %v1991, %v1828
    %v2025 = vmul.f32 %v1996, %v1827
    %v2026 = vmul.f32 %v2001, %v1829
    %v2027 = vmul.f32 %v2006, %v1837
    %v2028 = vmul.f32 %v2011, %v1845
    %v2029 = vmul.f32 %v2016, %v1844
    %v2030 = vmul.f32 %v2021, %v1846
    %v2031 = vsel %vm1876, %v2023, 0.0
    %v2032 = vsel %vm1876, %v2024, 0.0
    %v2033 = vadd.f32 %v2031, %v2032
    %v2034 = vsel %vm1876, %v2025, 0.0
    %v2035 = vadd.f32 %v2033, %v2034
    %v2036 = vsel %vm1876, %v2026, 0.0
    %v2037 = vadd.f32 %v2035, %v2036
    %v2038 = vsel %vm1876, %v2027, 0.0
    %v2039 = vadd.f32 %v2037, %v2038
    %v2040 = vsel %vm1876, %v2028, 0.0
    %v2041 = vadd.f32 %v2039, %v2040
    %v2042 = vsel %vm1876, %v2029, 0.0
    %v2043 = vadd.f32 %v2041, %v2042
    %v2044 = vsel %vm1876, %v2030, 0.0
    %v2045 = vadd.f32 %v2043, %v2044
    %v2046 = vadd.f32 %v1982, %v2045
    %2048 = vset.pattern.permute.xlu0 0
    %2049 = vperm.xlu0 %2048, %v1976
    %v2050 = vpop.permute.xlu0 %2049
    %v2052 = vrcp.pop %v2050
    %v2053 = vmul.f32 %v2046, %v2052
    %2054 = vst.msk [vmem:[#allocation8] sm:$0x3] %vm1876, %v2053
    // Predicated region
    $region54: #{tpu_custom_call.1} parent=1 // pred_check
      _
    $region55: #{tpu_custom_call.1} parent=1 // pred_check_branch
      %2056 = sbr.rel (0) target = $region57
    $region56: #{tpu_custom_call.1} parent=1 // pred_region
      %s2058 = ssub.s32 32, 32
      %2059 = vsyncadd [#allocation4], %s2058
      %s2061 = sshll.u32 [#allocation8], 4
      %s2062 = int_to_ptr.vmem [resolvable:$true] %s2061
      %2064 = dma.vmem_to_hbm [thread:$0]  %s2062, 32, %s10, [#allocation4]
    $region57: #{tpu_custom_call.1} parent=1 // pred_fallthru
      _
    // Predicated region
    $region58: #{tpu_custom_call.1} parent=1 // pred_check
      _
    $region59: #{tpu_custom_call.1} parent=1 // pred_check_branch
      %2066 = sbr.rel (0) target = $region61
    $region60: #{tpu_custom_call.1} parent=1 // pred_region
      %2067 = dma.done [#allocation4], 32
    $region61: #{tpu_custom_call.1} parent=1 // pred_fallthru
      _
    %2068 = vsyncpa [#allocation3], 1
    %2069 = vsyncpa [#allocation6], 1
    %2070 = vsyncpa [#allocation4], 1

</llo_original>
